<compile_context>
chip_gen: v5e
topology: v5e:2x2
jax: 0.10.0
libtpu: 0.0.40
codegen_flags: <defaults>
</compile_context>

<pallas_src>
import numpy as np
import jax
import jax.numpy as jnp
from jax.experimental import pallas as pl
from jax.experimental.pallas import tpu as pltpu

NBINS = 256   # np.histogram(..., 256, [0, 1])
LANES = 128


def _hist_eq_kernel(x_ref, o_ref, cdf_acc, tab_ref, max_acc):
    """Two-phase per-channel histogram equalization.

    Grid = (C, 2, T).  x_ref / o_ref blocks are (tile_rows, 128) f32.
      phase 0: accumulate cdf_acc[b, p] += (bin(x) <= b), track channel max.
      phase 1: at t == 0 build the 2-row LUT in tab_ref; every tile then
               applies it with a one-hot MXU matmul + linear interpolation.
    """
    ph = pl.program_id(1)
    t = pl.program_id(2)
    n_rows = x_ref.shape[0]

    # bin-index iota: bins on sublanes, pixels on lanes (hoisted out of loops).
    bins_sub = jax.lax.broadcasted_iota(jnp.int32, (NBINS, LANES), 0)

    @pl.when((ph == 0) & (t == 0))
    def _init():
        cdf_acc[...] = jnp.zeros((NBINS, LANES), jnp.float32)
        max_acc[...] = jnp.full((1, LANES), -jnp.inf, dtype=jnp.float32)

    @pl.when(ph == 0)
    def _accumulate():
        # Reference takes img_flat.max() over raw values (no range mask).
        max_acc[...] = jnp.maximum(
            max_acc[...], jnp.max(x_ref[...], axis=0, keepdims=True))

        @pl.loop(0, n_rows)
        def _rows(r):
            v = x_ref[pl.ds(r, 1), :]                              # (1, 128)
            s = v * float(NBINS)
            bidx = jnp.minimum(jnp.floor(s), float(NBINS - 1)).astype(jnp.int32)
            in_rng = (v >= 0.0) & (v <= 1.0)   # np.histogram range [0, 1]
            le = ((bidx <= bins_sub) & in_rng).astype(jnp.float32)  # (256, 128)
            cdf_acc[...] = cdf_acc[...] + le

    @pl.when((ph == 1) & (t == 0))
    def _build_lut():
        # cdf with bins on lanes: (1, 256) = ones(1,128) @ cdf_acc^T   (MXU).
        ones_row = jnp.ones((1, LANES), jnp.float32)
        cdf_lane = jnp.dot(ones_row, cdf_acc[...].T,
                           preferred_element_type=jnp.float32)      # (1, 256)
        total = jnp.max(cdf_lane)          # == cdf[255] == #in-range pixels
        xmax = jnp.max(max_acc[...])       # img_flat.max()
        scale = xmax / jnp.maximum(total, 1.0)   # guard empty histogram
        lut_lo = cdf_lane * scale                                   # (1, 256)
        # lut_hi[b] = lut_lo[min(b + 1, 255)] via a shift matrix on the MXU.
        i_s = jax.lax.broadcasted_iota(jnp.int32, (NBINS, NBINS), 0)
        i_l = jax.lax.broadcasted_iota(jnp.int32, (NBINS, NBINS), 1)
        shift = ((i_s == i_l + 1) |
                 ((i_s == NBINS - 1) & (i_l == NBINS - 1))).astype(jnp.float32)
        lut_hi = jnp.dot(lut_lo, shift, preferred_element_type=jnp.float32)
        sub8 = jax.lax.broadcasted_iota(jnp.int32, (8, NBINS), 0)
        tab_ref[...] = jnp.where(
            sub8 == 0, jnp.broadcast_to(lut_lo, (8, NBINS)),
            jnp.where(sub8 == 1, jnp.broadcast_to(lut_hi, (8, NBINS)), 0.0))

    @pl.when(ph == 1)
    def _apply():
        tab = tab_ref[...]                 # (8, 256); rows 0/1 = lo/hi tables

        @pl.loop(0, n_rows)
        def _rows(r):
            v = x_ref[pl.ds(r, 1), :]                              # (1, 128)
            s = v * float(NBINS)
            i_f = jnp.clip(jnp.floor(s), 0.0, float(NBINS - 1))
            frac = jnp.clip(s - i_f, 0.0, 1.0)
            oh = (i_f.astype(jnp.int32) == bins_sub).astype(jnp.float32)  # (256,128)
            res = jnp.dot(tab, oh, preferred_element_type=jnp.float32)    # (8,128)
            out = res[0:1, :] * (1.0 - frac) + res[1:2, :] * frac
            o_ref[pl.ds(r, 1), :] = jnp.clip(out, 0.0, 1.0)


def histogram_equalize_pallas(x, tile_rows=64):
    """Histogram-equalize every channel of a (C, H, W) image (always-apply)."""
    C, H, W = x.shape
    P = H * W
    x2 = x.reshape(C, P).astype(jnp.float32)

    rows = pl.cdiv(P, LANES)
    tr = max(8, min(tile_rows, ((rows + 7) // 8) * 8))   # multiple of 8
    rows_pad = ((rows + tr - 1) // tr) * tr
    p_pad = rows_pad * LANES
    # Pad with -1.0: outside the [0,1] histogram range, so padding never enters
    # the histogram/cdf and never raises the channel max (image assumed >= -1).
    x2 = jnp.pad(x2, ((0, 0), (0, p_pad - P)), constant_values=-1.0)
    n_tiles = rows_pad // tr
    x4 = x2.reshape(C, n_tiles, tr, LANES)

    out4 = pl.pallas_call(
        _hist_eq_kernel,
        out_shape=jax.ShapeDtypeStruct((C, n_tiles, tr, LANES), jnp.float32),
        grid=(C, 2, n_tiles),
        in_specs=[pl.BlockSpec((None, None, tr, LANES),
                               lambda c, ph, t: (c, t, 0, 0))],
        # During phase 0 stay parked on tile 0 (never written); phase 1 walks
        # the tiles and writes each block exactly once.
        out_specs=pl.BlockSpec((None, None, tr, LANES),
                               lambda c, ph, t: (c, t * ph, 0, 0)),
        scratch_shapes=[pltpu.VMEM((NBINS, LANES), jnp.float32),  # cdf accum
                        pltpu.VMEM((8, NBINS), jnp.float32),      # LUT (2 rows)
                        pltpu.VMEM((1, LANES), jnp.float32)],     # running max
        compiler_params=pltpu.CompilerParams(
            dimension_semantics=("parallel", "arbitrary", "arbitrary"),
            vmem_limit_bytes=48 * 1024 * 1024),
    )(x4)

    out2 = out4.reshape(C, p_pad)[:, :P]
    return out2.reshape(C, H, W)


def random_histogram_equalization(x, key, p=0.3):
    """Forward pass of RandomHistogramEqualization.

    With probability p, returns the per-channel histogram-equalized image
    (clamped to [0,1]); otherwise returns the input unchanged.  The kernel
    only runs when the branch is taken (lax.cond).
    """
    u = jax.random.uniform(key, ())
    return jax.lax.cond(u < p,
                        lambda t: histogram_equalize_pallas(t),
                        lambda t: t.astype(jnp.float32),
                        x)


def _numpy_reference(x_np):
    """Direct port of the PyTorch/numpy forward (always-apply branch)."""
    img = np.asarray(x_np, dtype=np.float32).transpose(1, 2, 0).copy()
    for c in range(img.shape[2]):
        flat = img[:, :, c].flatten()
        hist, bins = np.histogram(flat, 256, [0, 1])
        cdf = hist.cumsum()
        cdf_normalized = cdf * flat.max() / cdf.max()
        lut = np.interp(flat, bins[:-1], cdf_normalized)
        img[:, :, c] = lut.reshape(img[:, :, c].shape)
    out = img.transpose(2, 0, 1).astype(np.float32)
    return np.clip(out, 0.0, 1.0)


if __name__ == "__main__":
    key = jax.random.PRNGKey(0)
    k_img, k_coin = jax.random.split(key)

    # Small CHW image with values in [0, 1], as the module expects.
    x = jax.random.uniform(k_img, (4, 16, 16), dtype=jnp.float32)

    # Run the Pallas hot path (always-equalize) and check vs numpy reference.
    eq = histogram_equalize_pallas(x)
    jax.block_until_ready(eq)
    ref = _numpy_reference(np.asarray(x))
    np.testing.assert_allclose(np.asarray(eq), ref, atol=1e-3, rtol=1e-3)

    # Full forward with the probabilistic gate (p=0.3).
    out = random_histogram_equalization(x, k_coin, p=0.3)
    jax.block_until_ready(out)
    assert out.shape == x.shape and out.dtype == jnp.float32

    print("KERNEL_OK")
</pallas_src>

<mosaic_0001>
module attributes {stable_mosaic.version = 11 : i64} {
  func.func @_hist_eq_kernel(%arg0: i32, %arg1: i32, %arg2: i32, %arg3: memref<1x1x8x128xf32, #tpu.memory_space<vmem>>, %arg4: memref<1x1x8x128xf32, #tpu.memory_space<vmem>>, %arg5: memref<256x128xf32, #tpu.memory_space<vmem>>, %arg6: memref<8x256xf32, #tpu.memory_space<vmem>>, %arg7: memref<1x128xf32, #tpu.memory_space<vmem>>) attributes {dimension_semantics = [#tpu.dimension_semantics<parallel>, #tpu.dimension_semantics<arbitrary>, #tpu.dimension_semantics<arbitrary>], iteration_bounds = array<i64: 4, 2, 1>, scalar_prefetch = 0 : i64, scratch_operands = 3 : i64, tpu.core_type = #tpu.core_type<tc>, window_params = [{transform_indices = @transform_0, window_bounds = array<i64: 1, 1, 8, 128>}, {transform_indices = @transform_1, window_bounds = array<i64: 1, 1, 8, 128>}]} {
    %0 = tpu.iota {dimensions = array<i32: 0>} : vector<256x128xi32>
    %c0_i32 = arith.constant 0 : i32
    %1 = arith.cmpi eq, %arg1, %c0_i32 : i32
    %c0_i32_0 = arith.constant 0 : i32
    %2 = arith.cmpi eq, %arg2, %c0_i32_0 : i32
    %3 = arith.andi %1, %2 : i1
    %4 = arith.extui %3 : i1 to i32
    %c0_i32_1 = arith.constant 0 : i32
    %5 = arith.cmpi ne, %4, %c0_i32_1 : i32
    scf.if %5 {
      %cst = arith.constant 0.000000e+00 : f32
      %17 = vector.broadcast %cst : f32 to vector<256x128xf32>
      %c0 = arith.constant 0 : index
      %c0_8 = arith.constant 0 : index
      %18 = vector.load %arg5[%c0, %c0_8] : memref<256x128xf32, #tpu.memory_space<vmem>>, vector<256x128xf32>
      tpu.vector_store %arg5[%c0, %c0_8], %17 {strides = array<i32>} : memref<256x128xf32, #tpu.memory_space<vmem>>, vector<256x128xf32>,
      %cst_9 = arith.constant 0xFF800000 : f32
      %19 = vector.broadcast %cst_9 : f32 to vector<1x128xf32>
      %c0_10 = arith.constant 0 : index
      %c0_11 = arith.constant 0 : index
      %20 = vector.load %arg7[%c0_10, %c0_11] : memref<1x128xf32, #tpu.memory_space<vmem>>, vector<1x128xf32>
      tpu.vector_store %arg7[%c0_10, %c0_11], %19 {strides = array<i32>} : memref<1x128xf32, #tpu.memory_space<vmem>>, vector<1x128xf32>,
    } else {
    }
    %c0_i32_2 = arith.constant 0 : i32
    %6 = arith.cmpi eq, %arg1, %c0_i32_2 : i32
    %7 = arith.extui %6 : i1 to i32
    %c0_i32_3 = arith.constant 0 : i32
    %8 = arith.cmpi ne, %7, %c0_i32_3 : i32
    scf.if %8 {
      %c0 = arith.constant 0 : index
      %c0_8 = arith.constant 0 : index
      %17 = vector.load %arg7[%c0, %c0_8] : memref<1x128xf32, #tpu.memory_space<vmem>>, vector<1x128xf32>
      %c0_9 = arith.constant 0 : index
      %c0_10 = arith.constant 0 : index
      %c0_11 = arith.constant 0 : index
      %c0_12 = arith.constant 0 : index
      %18 = vector.load %arg3[%c0_9, %c0_10, %c0_11, %c0_12] : memref<1x1x8x128xf32, #tpu.memory_space<vmem>>, vector<1x1x8x128xf32>
      %19 = vector.shape_cast %18 : vector<1x1x8x128xf32> to vector<8x128xf32>
      %cst = arith.constant dense<0xFF800000> : vector<128xf32>
      %20 = vector.multi_reduction <maximumf>, %19, %cst [0] : vector<8x128xf32> to vector<128xf32>
      %21 = vector.shape_cast %20 : vector<128xf32> to vector<1x128xf32>
      %22 = arith.maximumf %17, %21 : vector<1x128xf32>
      %c0_13 = arith.constant 0 : index
      %c0_14 = arith.constant 0 : index
      %23 = vector.load %arg7[%c0_13, %c0_14] : memref<1x128xf32, #tpu.memory_space<vmem>>, vector<1x128xf32>
      tpu.vector_store %arg7[%c0_13, %c0_14], %22 {strides = array<i32>} : memref<1x128xf32, #tpu.memory_space<vmem>>, vector<1x128xf32>,
      %c0_i32_15 = arith.constant 0 : i32
      %c8_i32 = arith.constant 8 : i32
      %24 = arith.addi %c0_i32_15, %c8_i32 : i32
      %c1_i32_16 = arith.constant 1 : i32
      scf.for %arg8 = %c0_i32_15 to %24 step %c1_i32_16  : i32 {
        %c1_i32_18 = arith.constant 1 : i32
        %25 = arith.muli %arg8, %c1_i32_18 : i32
        %c0_i32_19 = arith.constant 0 : i32
        %26 = arith.addi %c0_i32_19, %25 : i32
        %c0_20 = arith.constant 0 : index
        %c0_21 = arith.constant 0 : index
        %27 = arith.index_cast %26 : i32 to index
        %c0_22 = arith.constant 0 : index
        %28 = vector.load %arg3[%c0_20, %c0_21, %27, %c0_22] : memref<1x1x8x128xf32, #tpu.memory_space<vmem>>, vector<1x1x1x128xf32>
        %29 = vector.shape_cast %28 : vector<1x1x1x128xf32> to vector<1x128xf32>
        %cst_23 = arith.constant 2.560000e+02 : f32
        %30 = vector.broadcast %cst_23 : f32 to vector<1x128xf32>
        %31 = arith.mulf %29, %30 : vector<1x128xf32>
        %32 = math.floor %31 : vector<1x128xf32>
        %cst_24 = arith.constant 2.550000e+02 : f32
        %33 = vector.broadcast %cst_24 : f32 to vector<1x128xf32>
        %34 = arith.minimumf %32, %33 : vector<1x128xf32>
        %35 = arith.fptosi %34 : vector<1x128xf32> to vector<1x128xi32>
        %cst_25 = arith.constant 0.000000e+00 : f32
        %36 = vector.broadcast %cst_25 : f32 to vector<1x128xf32>
        %37 = arith.cmpf oge, %29, %36 : vector<1x128xf32>
        %cst_26 = arith.constant 1.000000e+00 : f32
        %38 = vector.broadcast %cst_26 : f32 to vector<1x128xf32>
        %39 = arith.cmpf ole, %29, %38 : vector<1x128xf32>
        %40 = arith.andi %37, %39 : vector<1x128xi1>
        %41 = vector.broadcast %35 : vector<1x128xi32> to vector<256x128xi32>
        %42 = arith.cmpi sle, %41, %0 : vector<256x128xi32>
        %43 = vector.broadcast %40 : vector<1x128xi1> to vector<256x128xi1>
        %44 = arith.andi %42, %43 : vector<256x128xi1>
        %45 = arith.extui %44 : vector<256x128xi1> to vector<256x128xi32>
        %46 = arith.sitofp %45 : vector<256x128xi32> to vector<256x128xf32>
        %c0_27 = arith.constant 0 : index
        %c0_28 = arith.constant 0 : index
        %47 = vector.load %arg5[%c0_27, %c0_28] : memref<256x128xf32, #tpu.memory_space<vmem>>, vector<256x128xf32>
        %48 = arith.addf %47, %46 : vector<256x128xf32>
        %c0_29 = arith.constant 0 : index
        %c0_30 = arith.constant 0 : index
        %49 = vector.load %arg5[%c0_29, %c0_30] : memref<256x128xf32, #tpu.memory_space<vmem>>, vector<256x128xf32>
        tpu.vector_store %arg5[%c0_29, %c0_30], %48 {strides = array<i32>} : memref<256x128xf32, #tpu.memory_space<vmem>>, vector<256x128xf32>,
      }
      %c8_i32_17 = arith.constant 8 : i32
    } else {
    }
    %c1_i32 = arith.constant 1 : i32
    %9 = arith.cmpi eq, %arg1, %c1_i32 : i32
    %c0_i32_4 = arith.constant 0 : i32
    %10 = arith.cmpi eq, %arg2, %c0_i32_4 : i32
    %11 = arith.andi %9, %10 : i1
    %12 = arith.extui %11 : i1 to i32
    %c0_i32_5 = arith.constant 0 : i32
    %13 = arith.cmpi ne, %12, %c0_i32_5 : i32
    scf.if %13 {
      %cst = arith.constant 1.000000e+00 : f32
      %17 = vector.broadcast %cst : f32 to vector<1x128xf32>
      %c0 = arith.constant 0 : index
      %c0_8 = arith.constant 0 : index
      %18 = vector.load %arg5[%c0, %c0_8] : memref<256x128xf32, #tpu.memory_space<vmem>>, vector<256x128xf32>
      %19 = tpu.transpose %18, [1, 0] : vector<256x128xf32> -> vector<128x256xf32>
      %cst_9 = arith.constant dense<0.000000e+00> : vector<1x256xf32>
      %20 = tpu.matmul %17, %19, %cst_9 {dimension_numbers = #tpu.dot_dimension_numbers<[1], [0], [0], [1], [0, 0, 1, 1], [], []>} : vector<1x128xf32>, vector<128x256xf32>, vector<1x256xf32> -> vector<1x256xf32>
      %21 = vector.shape_cast %20 : vector<1x256xf32> to vector<1x1x256xf32>
      %cst_10 = arith.constant dense<0xFF800000> : vector<1xf32>
      %22 = vector.multi_reduction <maximumf>, %21, %cst_10 [1, 2] : vector<1x1x256xf32> to vector<1xf32>
      %23 = vector.shape_cast %22 : vector<1xf32> to vector<1x1x1xf32>
      %24 = vector.extract %23[0, 0, 0] : f32 from vector<1x1x1xf32>
      %c0_11 = arith.constant 0 : index
      %c0_12 = arith.constant 0 : index
      %25 = vector.load %arg7[%c0_11, %c0_12] : memref<1x128xf32, #tpu.memory_space<vmem>>, vector<1x128xf32>
      %26 = vector.shape_cast %25 : vector<1x128xf32> to vector<1x1x128xf32>
      %cst_13 = arith.constant dense<0xFF800000> : vector<1xf32>
      %27 = vector.multi_reduction <maximumf>, %26, %cst_13 [1, 2] : vector<1x1x128xf32> to vector<1xf32>
      %28 = vector.shape_cast %27 : vector<1xf32> to vector<1x1x1xf32>
      %29 = vector.extract %28[0, 0, 0] : f32 from vector<1x1x1xf32>
      %cst_14 = arith.constant 1.000000e+00 : f32
      %30 = arith.maximumf %24, %cst_14 : f32
      %31 = arith.divf %29, %30 : f32
      %32 = vector.broadcast %31 : f32 to vector<1x256xf32>
      %33 = arith.mulf %20, %32 : vector<1x256xf32>
      %34 = tpu.iota {dimensions = array<i32: 0>} : vector<256x256xi32>
      %35 = tpu.iota {dimensions = array<i32: 1>} : vector<256x256xi32>
      %c1_i32_15 = arith.constant 1 : i32
      %36 = vector.broadcast %c1_i32_15 : i32 to vector<256x256xi32>
      %37 = arith.addi %35, %36 : vector<256x256xi32>
      %38 = arith.cmpi eq, %34, %37 : vector<256x256xi32>
      %c255_i32 = arith.constant 255 : i32
      %39 = vector.broadcast %c255_i32 : i32 to vector<256x256xi32>
      %40 = arith.cmpi eq, %34, %39 : vector<256x256xi32>
      %c255_i32_16 = arith.constant 255 : i32
      %41 = vector.broadcast %c255_i32_16 : i32 to vector<256x256xi32>
      %42 = arith.cmpi eq, %35, %41 : vector<256x256xi32>
      %43 = arith.andi %40, %42 : vector<256x256xi1>
      %44 = arith.ori %38, %43 : vector<256x256xi1>
      %45 = arith.extui %44 : vector<256x256xi1> to vector<256x256xi32>
      %46 = arith.sitofp %45 : vector<256x256xi32> to vector<256x256xf32>
      %cst_17 = arith.constant dense<0.000000e+00> : vector<1x256xf32>
      %47 = tpu.matmul %33, %46, %cst_17 {dimension_numbers = #tpu.dot_dimension_numbers<[1], [0], [0], [1], [0, 0, 1, 1], [], []>} : vector<1x256xf32>, vector<256x256xf32>, vector<1x256xf32> -> vector<1x256xf32>
      %48 = tpu.iota {dimensions = array<i32: 0>} : vector<8x256xi32>
      %c0_i32_18 = arith.constant 0 : i32
      %49 = vector.broadcast %c0_i32_18 : i32 to vector<8x256xi32>
      %50 = arith.cmpi eq, %48, %49 : vector<8x256xi32>
      %51 = vector.shape_cast %33 : vector<1x256xf32> to vector<1x256xf32>
      %52 = vector.broadcast %51 : vector<1x256xf32> to vector<8x256xf32>
      %c1_i32_19 = arith.constant 1 : i32
      %53 = vector.broadcast %c1_i32_19 : i32 to vector<8x256xi32>
      %54 = arith.cmpi eq, %48, %53 : vector<8x256xi32>
      %55 = vector.shape_cast %47 : vector<1x256xf32> to vector<1x256xf32>
      %56 = vector.broadcast %55 : vector<1x256xf32> to vector<8x256xf32>
      %cst_20 = arith.constant 0.000000e+00 : f32
      %57 = vector.broadcast %cst_20 : f32 to vector<8x256xf32>
      %58 = arith.select %54, %56, %57 : vector<8x256xi1>, vector<8x256xf32>
      %59 = arith.select %50, %52, %58 : vector<8x256xi1>, vector<8x256xf32>
      %c0_21 = arith.constant 0 : index
      %c0_22 = arith.constant 0 : index
      %60 = vector.load %arg6[%c0_21, %c0_22] : memref<8x256xf32, #tpu.memory_space<vmem>>, vector<8x256xf32>
      tpu.vector_store %arg6[%c0_21, %c0_22], %59 {strides = array<i32>} : memref<8x256xf32, #tpu.memory_space<vmem>>, vector<8x256xf32>,
    } else {
    }
    %c1_i32_6 = arith.constant 1 : i32
    %14 = arith.cmpi eq, %arg1, %c1_i32_6 : i32
    %15 = arith.extui %14 : i1 to i32
    %c0_i32_7 = arith.constant 0 : i32
    %16 = arith.cmpi ne, %15, %c0_i32_7 : i32
    scf.if %16 {
      %c0 = arith.constant 0 : index
      %c0_8 = arith.constant 0 : index
      %17 = vector.load %arg6[%c0, %c0_8] : memref<8x256xf32, #tpu.memory_space<vmem>>, vector<8x256xf32>
      %c0_i32_9 = arith.constant 0 : i32
      %c8_i32 = arith.constant 8 : i32
      %18 = arith.addi %c0_i32_9, %c8_i32 : i32
      %c1_i32_10 = arith.constant 1 : i32
      scf.for %arg8 = %c0_i32_9 to %18 step %c1_i32_10  : i32 {
        %c1_i32_12 = arith.constant 1 : i32
        %19 = arith.muli %arg8, %c1_i32_12 : i32
        %c0_i32_13 = arith.constant 0 : i32
        %20 = arith.addi %c0_i32_13, %19 : i32
        %c0_14 = arith.constant 0 : index
        %c0_15 = arith.constant 0 : index
        %21 = arith.index_cast %20 : i32 to index
        %c0_16 = arith.constant 0 : index
        %22 = vector.load %arg3[%c0_14, %c0_15, %21, %c0_16] : memref<1x1x8x128xf32, #tpu.memory_space<vmem>>, vector<1x1x1x128xf32>
        %23 = vector.shape_cast %22 : vector<1x1x1x128xf32> to vector<1x128xf32>
        %cst = arith.constant 2.560000e+02 : f32
        %24 = vector.broadcast %cst : f32 to vector<1x128xf32>
        %25 = arith.mulf %23, %24 : vector<1x128xf32>
        %26 = math.floor %25 : vector<1x128xf32>
        %cst_17 = arith.constant 0.000000e+00 : f32
        %cst_18 = arith.constant 2.550000e+02 : f32
        %27 = vector.broadcast %cst_17 : f32 to vector<1x128xf32>
        %28 = arith.maximumf %27, %26 : vector<1x128xf32>
        %29 = vector.broadcast %cst_18 : f32 to vector<1x128xf32>
        %30 = arith.minimumf %29, %28 : vector<1x128xf32>
        %31 = arith.subf %25, %30 : vector<1x128xf32>
        %cst_19 = arith.constant 0.000000e+00 : f32
        %cst_20 = arith.constant 1.000000e+00 : f32
        %32 = vector.broadcast %cst_19 : f32 to vector<1x128xf32>
        %33 = arith.maximumf %32, %31 : vector<1x128xf32>
        %34 = vector.broadcast %cst_20 : f32 to vector<1x128xf32>
        %35 = arith.minimumf %34, %33 : vector<1x128xf32>
        %36 = arith.fptosi %30 : vector<1x128xf32> to vector<1x128xi32>
        %37 = vector.broadcast %36 : vector<1x128xi32> to vector<256x128xi32>
        %38 = arith.cmpi eq, %37, %0 : vector<256x128xi32>
        %39 = arith.extui %38 : vector<256x128xi1> to vector<256x128xi32>
        %40 = arith.sitofp %39 : vector<256x128xi32> to vector<256x128xf32>
        %cst_21 = arith.constant dense<0.000000e+00> : vector<8x128xf32>
        %41 = tpu.matmul %17, %40, %cst_21 {dimension_numbers = #tpu.dot_dimension_numbers<[1], [0], [0], [1], [0, 0, 1, 1], [], []>} : vector<8x256xf32>, vector<256x128xf32>, vector<8x128xf32> -> vector<8x128xf32>
        %42 = vector.extract_strided_slice %41 {offsets = [0, 0], sizes = [1, 128], strides = [1, 1]} : vector<8x128xf32> to vector<1x128xf32>
        %cst_22 = arith.constant 1.000000e+00 : f32
        %43 = vector.broadcast %cst_22 : f32 to vector<1x128xf32>
        %44 = arith.subf %43, %35 : vector<1x128xf32>
        %45 = arith.mulf %42, %44 : vector<1x128xf32>
        %46 = vector.extract_strided_slice %41 {offsets = [1, 0], sizes = [1, 128], strides = [1, 1]} : vector<8x128xf32> to vector<1x128xf32>
        %47 = arith.mulf %46, %35 : vector<1x128xf32>
        %48 = arith.addf %45, %47 : vector<1x128xf32>
        %cst_23 = arith.constant 0.000000e+00 : f32
        %cst_24 = arith.constant 1.000000e+00 : f32
        %49 = vector.broadcast %cst_23 : f32 to vector<1x128xf32>
        %50 = arith.maximumf %49, %48 : vector<1x128xf32>
        %51 = vector.broadcast %cst_24 : f32 to vector<1x128xf32>
        %52 = arith.minimumf %51, %50 : vector<1x128xf32>
        %c0_25 = arith.constant 0 : index
        %c0_26 = arith.constant 0 : index
        %53 = arith.index_cast %20 : i32 to index
        %c0_27 = arith.constant 0 : index
        %54 = vector.load %arg4[%c0_25, %c0_26, %53, %c0_27] : memref<1x1x8x128xf32, #tpu.memory_space<vmem>>, vector<1x1x1x128xf32>
        %55 = vector.shape_cast %54 : vector<1x1x1x128xf32> to vector<1x128xf32>
        %56 = vector.shape_cast %52 : vector<1x128xf32> to vector<1x1x1x128xf32>
        tpu.vector_store %arg4[%c0_25, %c0_26, %53, %c0_27], %56 {strides = array<i32>} : memref<1x1x8x128xf32, #tpu.memory_space<vmem>>, vector<1x1x1x128xf32>,
      }
      %c8_i32_11 = arith.constant 8 : i32
    } else {
    }
    return
  }
  func.func @transform_0(%arg0: i32, %arg1: i32, %arg2: i32) -> (i32, i32, i32, i32) {
    %c0_i32 = arith.constant 0 : i32
    %c0_i32_0 = arith.constant 0 : i32
    %c0_i32_1 = arith.constant 0 : i32
    return %arg0, %arg2, %c0_i32, %c0_i32_0 : i32, i32, i32, i32
  }
  func.func @transform_1(%arg0: i32, %arg1: i32, %arg2: i32) -> (i32, i32, i32, i32) {
    %0 = arith.muli %arg2, %arg1 : i32
    %c0_i32 = arith.constant 0 : i32
    %c0_i32_0 = arith.constant 0 : i32
    %c0_i32_1 = arith.constant 0 : i32
    return %arg0, %0, %c0_i32, %c0_i32_0 : i32, i32, i32, i32
  }
}

</mosaic_0001>

<llo_original>
// kernel: tpu_custom_call.1
$region0: #{tpu_custom_call.1}
  #allocation0 [shape = 'u32[]', space=smem, size = 0x4, offset = 0x4, fixed_abs, tag = 'smem constant byte address 0x4 - core index']
  #allocation1 [shape = 'u32[72,128]{1,0:T(1,128)}', space=vmem, size = 0x9000, scoped, tag = 'internal scratch']
  #allocation2 [shape = 'f32[256,128]{1,0:T(8,128)}', space=vmem, size = 0x20000, scoped, tag = 'scratch operand']
  #allocation3 [shape = 'f32[8,256]{1,0:T(8,128)}', space=vmem, size = 0x2000, scoped, tag = 'scratch operand']
  #allocation4 [shape = 'f32[1,128]{1,0:T(1,128)}', space=vmem, size = 0x200, scoped, tag = 'scratch operand']
  %s0 = inlined_call_operand.hbm [shape: f32[4,1,8,128], index: 0, kind: input, shape index: {}]
  %s1 = inlined_call_operand.hbm [shape: f32[4,1,8,128], index: 1, kind: output, shape index: {}]
  %s2 = sld [smem:[#allocation0]]
  $region71: #{tpu_custom_call.1} parent=0
    _
  %s4 = ssub.s32 1, %s2
  %s5 = scalar_select 0, %s4, %s2
  $region1: #{tpu_custom_call.1} parent=0
    #allocation5 [shape = 'u8[8192]{0}', space=vmem, size = 0x2000, scoped, tag = 'input window, operand 0']
    #allocation6 [shape = 's32[2]{0}', space=sflag, size = 0x8, scoped, tag = 'scoped memory for tpu_custom_call.1']
    #allocation7 [shape = 's32[2]{0}', space=sflag, size = 0x8, scoped, tag = 'scoped memory for tpu_custom_call.1']
    #allocation8 [shape = 'u8[8192]{0}', space=vmem, size = 0x2000, scoped, tag = 'output window, operand 0']
    %6 = vsyncpa [#allocation6], 0
    %s7 = scalar_lea.sflag [#allocation6], 1
    %8 = vsyncpa %s7, 0
    %9 = vsyncpa [#allocation7], 0
    %s10 = scalar_lea.sflag [#allocation7], 1
    %11 = vsyncpa %s10, 0
    loop: start=0, step=1, limit=10
    $region2: #{tpu_custom_call.1} parent=1 // loop_pre_header
      _
    $region3: #{tpu_custom_call.1} parent=1 // loop_header
      %s13 = sphi 0, %s17
      %p14 = scmp.ge.s32.totalorder %s13, 10
      %s20 = sphi 0, %s39
      %s21 = sphi 0, %s35
      %s22 = sphi 0, %s31
      %s23 = sphi 0, %s20
      %s24 = sphi 0, %s21
      %s25 = sphi 0, %s22
      %s26 = sphi 0, %s23
      %s27 = sphi 0, %s24
      %s28 = sphi 0, %s25
      %s44 = sphi 0, %s46
      %s47 = sphi 0, %s44
      %s48 = sphi 0, %s47
      %s64 = sphi 0, %s48
      %s74 = sphi 0, %s76
      %s77 = sphi 0, %s74
      %s78 = sphi 0, %s77
      %s94 = sphi 0, %s78
    $region4: #{tpu_custom_call.1} parent=1 // loop_header_branch
      %16 = sbr.rel (%p14) target = $region8
    $region5: #{tpu_custom_call.1} parent=1 // loop_body
      %s18 = ssub.s32 %s13, 1
      %s19 = ssub.s32 %s13, 2
      %s29 = sadd.s32 1, %s22
      %p30 = scmp.ge.s32.totalorder %s29, 1
      %s31 = scalar_select %p30, 0, %s29
      %s32 = sadd.s32 1, %s21
      %s33 = scalar_select %p30, %s32, %s21
      %p34 = scmp.ge.s32.totalorder %s33, 2
      %s35 = scalar_select %p34, 0, %s33
      %s36 = sadd.s32 1, %s20
      %s37 = scalar_select %p34, %s36, %s20
      %p38 = scmp.ge.s32.totalorder %s37, 4
      %s39 = scalar_select %p38, 0, %s37
      %s40 = ssub.s32 %s20, %s39
      %s41 = ssub.s32 %s22, %s31
      %s42 = sor.u32 %s40, %s41
      %p43 = scmp.eq.s32.totalorder %s42, 0
      %s45 = sadd.s32 %s44, 1
      %s46 = scalar_select %p43, %s44, %s45
      %p49 = pneg %p43
      %p50 = scmp.eq.s32.totalorder %s13, 7
      %p51 = por %p49, %p50
      %p52 = scmp.ne.s32.totalorder %s44, %s47
      %p53 = scmp.eq.s32.totalorder %s13, 0
      %p54 = por %p52, %p53
      %p55 = scmp.ne.s32.totalorder %s44, %s47
      %p56 = scmp.eq.s32.totalorder %s18, 7
      %p57 = por %p55, %p56
      %p58 = scmp.ne.s32.totalorder %s47, %s48
      %p59 = scmp.eq.s32.totalorder %s18, 0
      %p60 = por %p58, %p59
      %p61 = scmp.ne.s32.totalorder %s47, %s48
      %p62 = scmp.eq.s32.totalorder %s19, 7
      %p63 = por %p61, %p62
      %p65 = scmp.ne.s32.totalorder %s48, %s64
      %p66 = scmp.eq.s32.totalorder %s19, 0
      %p67 = por %p65, %p66
      %s68 = smul.u32 %s22, %s21
      %s69 = smul.u32 %s31, %s35
      %s70 = ssub.s32 %s20, %s39
      %s71 = ssub.s32 %s68, %s69
      %s72 = sor.u32 %s70, %s71
      %p73 = scmp.eq.s32.totalorder %s72, 0
      %s75 = sadd.s32 %s74, 1
      %s76 = scalar_select %p73, %s74, %s75
      %p79 = pneg %p73
      %p80 = scmp.eq.s32.totalorder %s13, 7
      %p81 = por %p79, %p80
      %p82 = scmp.ne.s32.totalorder %s74, %s77
      %p83 = scmp.eq.s32.totalorder %s13, 0
      %p84 = por %p82, %p83
      %p85 = scmp.ne.s32.totalorder %s74, %s77
      %p86 = scmp.eq.s32.totalorder %s18, 7
      %p87 = por %p85, %p86
      %p88 = scmp.ne.s32.totalorder %s77, %s78
      %p89 = scmp.eq.s32.totalorder %s18, 0
      %p90 = por %p88, %p89
      %p91 = scmp.ne.s32.totalorder %s77, %s78
      %p92 = scmp.eq.s32.totalorder %s19, 7
      %p93 = por %p91, %p92
      %p95 = scmp.ne.s32.totalorder %s78, %s94
      %p96 = scmp.eq.s32.totalorder %s19, 0
      %p97 = por %p95, %p96
      %p98 = scmp.le.s32.totalorder 1, %s13
      %p99 = scmp.lt.s32.totalorder %s13, 9
      %p100 = pnand %p98, %p99
      %p101 = pneg %p100
      // Predicated region
      $region9: #{tpu_custom_call.1} parent=5 // pred_check
        _
      $region10: #{tpu_custom_call.1} parent=5 // pred_check_branch
        %103 = sbr.rel (%p100) target = $region12
      $region11: #{tpu_custom_call.1} parent=5 // pred_region
        %s104 = ssub.s32 %s13, 1
      $region12: #{tpu_custom_call.1} parent=5 // pred_fallthru
        _
      %p105 = scmp.lt.s32.totalorder %s13, 8
      // Predicated region
      $region13: #{tpu_custom_call.1} parent=5 // pred_check
        %p106 = pneg %p105
      $region14: #{tpu_custom_call.1} parent=5 // pred_check_branch
        %108 = sbr.rel (%p106) target = $region16
      $region15: #{tpu_custom_call.1} parent=5 // pred_region
        // Predicated region
        $region17: #{tpu_custom_call.1} parent=15 // pred_check
          %p109 = pneg %p54
        $region18: #{tpu_custom_call.1} parent=15 // pred_check_branch
          %111 = sbr.rel (%p109) target = $region20
        $region19: #{tpu_custom_call.1} parent=15 // pred_region
          %s112 = sand.u32 %s44, 1
          %s113 = scalar_lea.sflag [#allocation6], %s112
          %s114 = sand.u32 %s44, 1
          %s115 = smul.addr %s114, 8
          %s116 = scalar_lea.vmem [#allocation5], %s115
          %118 = vsyncadd %s113, 0
          %s119 = sadd.s32 %s22, %s20
          %s120 = smul.addr %s119, 8
          %s121 = scalar_lea.hbm %s0, %s120
          %s123 = sshll.u32 %s121, 4
          %s124 = int_to_ptr.hbm [resolvable:$true] %s123
          %s125 = sshll.u32 %s116, 4
          %s126 = int_to_ptr.vmem [resolvable:$true] %s125
          %128 = dma.hbm_to_vmem [thread:$0]  %s124, 128, %s126, %s113
        $region20: #{tpu_custom_call.1} parent=15 // pred_fallthru
          _
      $region16: #{tpu_custom_call.1} parent=5 // pred_fallthru
        _
      %p129 = scmp.le.s32.totalorder 1, %s13
      %p130 = scmp.lt.s32.totalorder %s13, 9
      %p131 = pnand %p129, %p130
      %p132 = pneg %p131
      // Predicated region
      $region21: #{tpu_custom_call.1} parent=5 // pred_check
        _
      $region22: #{tpu_custom_call.1} parent=5 // pred_check_branch
        %134 = sbr.rel (%p131) target = $region24
      $region23: #{tpu_custom_call.1} parent=5 // pred_region
        %s135 = ssub.s32 %s13, 1
        %s136 = sand.u32 %s47, 1
        %s137 = scalar_lea.sflag [#allocation6], %s136
        %s138 = sand.u32 %s47, 1
        %s139 = smul.addr %s138, 8
        %s140 = scalar_lea.vmem [#allocation5], %s139
        // Predicated region
        $region25: #{tpu_custom_call.1} parent=23 // pred_check
          %p141 = pneg %p60
        $region26: #{tpu_custom_call.1} parent=23 // pred_check_branch
          %143 = sbr.rel (%p141) target = $region28
        $region27: #{tpu_custom_call.1} parent=23 // pred_region
          %145 = dma.done %s137, 128
        $region28: #{tpu_custom_call.1} parent=23 // pred_fallthru
          _
        %s146 = sand.u32 %s47, 1
        %s147 = scalar_lea.sflag [#allocation6], %s146
        %s148 = sand.u32 %s47, 1
        %s149 = smul.addr %s148, 8
        %s150 = scalar_lea.vmem [#allocation5], %s149
        %p151 = pneg %p60
        %p152 = pneg %p57
        %p153 = pneg %p90
        %p154 = pneg %p87
        %s155 = sand.u32 %s77, 1
        %s156 = scalar_lea.sflag [#allocation7], %s155
        %s157 = sand.u32 %s77, 1
        %s158 = smul.addr %s157, 8
        %s159 = scalar_lea.vmem [#allocation8], %s158
        %s160 = smul.u32 %s25, %s24
        %v161 = vlaneseq
        %v162 = vshrl.u32 %v161, 7
        %v163 = vadd.s32 %v162, 8
        %v164 = vadd.s32 %v162, 16
        %v165 = vadd.s32 %v162, 24
        %v166 = vadd.s32 %v162, 32
        %v167 = vadd.s32 %v162, 40
        %v168 = vadd.s32 %v162, 48
        %v169 = vadd.s32 %v162, 56
        %v170 = vadd.s32 %v162, 64
        %v171 = vadd.s32 %v162, 72
        %v172 = vadd.s32 %v162, 80
        %v173 = vadd.s32 %v162, 88
        %v174 = vadd.s32 %v162, 96
        %v175 = vadd.s32 %v162, 104
        %v176 = vadd.s32 %v162, 112
        %v177 = vadd.s32 %v162, 120
        %v178 = vadd.s32 %v162, 128
        %v179 = vadd.s32 %v162, 136
        %v180 = vadd.s32 %v162, 144
        %v181 = vadd.s32 %v162, 152
        %v182 = vadd.s32 %v162, 160
        %v183 = vadd.s32 %v162, 168
        %v184 = vadd.s32 %v162, 176
        %v185 = vadd.s32 %v162, 184
        %v186 = vadd.s32 %v162, 192
        %v187 = vadd.s32 %v162, 200
        %v188 = vadd.s32 %v162, 208
        %v189 = vadd.s32 %v162, 216
        %v190 = vadd.s32 %v162, 224
        %v191 = vadd.s32 %v162, 232
        %v192 = vadd.s32 %v162, 240
        %v193 = vadd.s32 %v162, 248
        %p194 = scmp.eq.s32.totalorder %s24, 0
        %p195 = scmp.eq.s32.totalorder %s25, 0
        %p196 = pnand %p194, %p195
        %p197 = pneg %p196
        // Predicated region
        $region29: #{tpu_custom_call.1} parent=23 // pred_check
          _
        $region30: #{tpu_custom_call.1} parent=23 // pred_check_branch
          %199 = sbr.rel (%p196) target = $region32
        $region31: #{tpu_custom_call.1} parent=23 // pred_region
          %200 = vst [vmem:[#allocation2] sm:$0xff] 0.0
          %201 = vst [vmem:[#allocation2 + $0x8] sm:$0xff] 0.0
          %202 = vst [vmem:[#allocation2 + $0x10] sm:$0xff] 0.0
          %203 = vst [vmem:[#allocation2 + $0x18] sm:$0xff] 0.0
          %204 = vst [vmem:[#allocation2 + $0x20] sm:$0xff] 0.0
          %205 = vst [vmem:[#allocation2 + $0x28] sm:$0xff] 0.0
          %206 = vst [vmem:[#allocation2 + $0x30] sm:$0xff] 0.0
          %207 = vst [vmem:[#allocation2 + $0x38] sm:$0xff] 0.0
          %208 = vst [vmem:[#allocation2 + $0x40] sm:$0xff] 0.0
          %209 = vst [vmem:[#allocation2 + $0x48] sm:$0xff] 0.0
          %210 = vst [vmem:[#allocation2 + $0x50] sm:$0xff] 0.0
          %211 = vst [vmem:[#allocation2 + $0x58] sm:$0xff] 0.0
          %212 = vst [vmem:[#allocation2 + $0x60] sm:$0xff] 0.0
          %213 = vst [vmem:[#allocation2 + $0x68] sm:$0xff] 0.0
          %214 = vst [vmem:[#allocation2 + $0x70] sm:$0xff] 0.0
          %215 = vst [vmem:[#allocation2 + $0x78] sm:$0xff] 0.0
          %216 = vst [vmem:[#allocation2 + $0x80] sm:$0xff] 0.0
          %217 = vst [vmem:[#allocation2 + $0x88] sm:$0xff] 0.0
          %218 = vst [vmem:[#allocation2 + $0x90] sm:$0xff] 0.0
          %219 = vst [vmem:[#allocation2 + $0x98] sm:$0xff] 0.0
          %220 = vst [vmem:[#allocation2 + $0xa0] sm:$0xff] 0.0
          %221 = vst [vmem:[#allocation2 + $0xa8] sm:$0xff] 0.0
          %222 = vst [vmem:[#allocation2 + $0xb0] sm:$0xff] 0.0
          %223 = vst [vmem:[#allocation2 + $0xb8] sm:$0xff] 0.0
          %224 = vst [vmem:[#allocation2 + $0xc0] sm:$0xff] 0.0
          %225 = vst [vmem:[#allocation2 + $0xc8] sm:$0xff] 0.0
          %226 = vst [vmem:[#allocation2 + $0xd0] sm:$0xff] 0.0
          %227 = vst [vmem:[#allocation2 + $0xd8] sm:$0xff] 0.0
          %228 = vst [vmem:[#allocation2 + $0xe0] sm:$0xff] 0.0
          %229 = vst [vmem:[#allocation2 + $0xe8] sm:$0xff] 0.0
          %230 = vst [vmem:[#allocation2 + $0xf0] sm:$0xff] 0.0
          %231 = vst [vmem:[#allocation2 + $0xf8] sm:$0xff] 0.0
          %232 = vst [vmem:[#allocation4] sm:$0x1] -inf
        $region32: #{tpu_custom_call.1} parent=23 // pred_fallthru
          _
        // Predicated region
        $region33: #{tpu_custom_call.1} parent=23 // pred_check
          %p233 = pneg %p194
        $region34: #{tpu_custom_call.1} parent=23 // pred_check_branch
          %235 = sbr.rel (%p233) target = $region36
        $region35: #{tpu_custom_call.1} parent=23 // pred_region
          %v236 = vld [vmem:[#allocation4] sm:$0x1]
          %v237 = vld [vmem:[%s140] sm:$0xff]
          %v238 = vrot.slane %v237, 4
          %v239 = vmax.f32 %v237, %v238
          %v240 = vrot.slane %v239, 2
          %v241 = vmax.f32 %v239, %v240
          %v242 = vrot.slane %v241, 1
          %v243 = vmax.f32 %v241, %v242
          %v244 = vmax.f32 %v236, %v243
          %245 = vst [vmem:[#allocation4] sm:$0x1] %v244
          loop: start=0, step=1, limit=8
          $region37: #{tpu_custom_call.1} parent=35 // loop_pre_header
            _
          $region38: #{tpu_custom_call.1} parent=35 // loop_header
            %s247 = sphi 0, %s251
            %p248 = scmp.ge.s32.totalorder %s247, 8
          $region39: #{tpu_custom_call.1} parent=35 // loop_header_branch
            %250 = sbr.rel (%p248) target = $region43
          $region40: #{tpu_custom_call.1} parent=35 // loop_body
            %s252 = scalar_lea.vmem %s140, %s247 [#allocation5]
            %v253 = vld [vmem:[%s252] sm:$0x1]
            %v254 = vmul.f32 %v253, 256.0
            %v255 = vfloor.f32 %v254
            %v256 = vmin.f32 %v255, 255.0
            %v257 = vcvt.f32.s32.to.zero.pseudo %v256
            %vm258 = vcmp.ge.f32.partialorder %v253, 0.0
            %vm259 = vcmp.le.f32.partialorder %v253, 1.0
            %vm260 = vmand %vm258, %vm259
            %v261 = vperm.slane %v257, 0
            %vm262 = vcmp.le.s32.totalorder %v261, %v162
            %vm263 = vcmp.le.s32.totalorder %v261, %v163
            %vm264 = vcmp.le.s32.totalorder %v261, %v164
            %vm265 = vcmp.le.s32.totalorder %v261, %v165
            %vm266 = vcmp.le.s32.totalorder %v261, %v166
            %vm267 = vcmp.le.s32.totalorder %v261, %v167
            %vm268 = vcmp.le.s32.totalorder %v261, %v168
            %vm269 = vcmp.le.s32.totalorder %v261, %v169
            %vm270 = vcmp.le.s32.totalorder %v261, %v170
            %vm271 = vcmp.le.s32.totalorder %v261, %v171
            %vm272 = vcmp.le.s32.totalorder %v261, %v172
            %vm273 = vcmp.le.s32.totalorder %v261, %v173
            %vm274 = vcmp.le.s32.totalorder %v261, %v174
            %vm275 = vcmp.le.s32.totalorder %v261, %v175
            %vm276 = vcmp.le.s32.totalorder %v261, %v176
            %vm277 = vcmp.le.s32.totalorder %v261, %v177
            %vm278 = vcmp.le.s32.totalorder %v261, %v178
            %vm279 = vcmp.le.s32.totalorder %v261, %v179
            %vm280 = vcmp.le.s32.totalorder %v261, %v180
            %vm281 = vcmp.le.s32.totalorder %v261, %v181
            %vm282 = vcmp.le.s32.totalorder %v261, %v182
            %vm283 = vcmp.le.s32.totalorder %v261, %v183
            %vm284 = vcmp.le.s32.totalorder %v261, %v184
            %vm285 = vcmp.le.s32.totalorder %v261, %v185
            %vm286 = vcmp.le.s32.totalorder %v261, %v186
            %vm287 = vcmp.le.s32.totalorder %v261, %v187
            %vm288 = vcmp.le.s32.totalorder %v261, %v188
            %vm289 = vcmp.le.s32.totalorder %v261, %v189
            %vm290 = vcmp.le.s32.totalorder %v261, %v190
            %vm291 = vcmp.le.s32.totalorder %v261, %v191
            %vm292 = vcmp.le.s32.totalorder %v261, %v192
            %vm293 = vcmp.le.s32.totalorder %v261, %v193
            %v294 = vsel %vm260, 1, 0
            %v295 = vperm.slane %v294, 0
            %vm296 = vcmp.eq.s32.totalorder %v295, 1
            %vm297 = vmand %vm262, %vm296
            %vm298 = vmand %vm263, %vm296
            %vm299 = vmand %vm264, %vm296
            %vm300 = vmand %vm265, %vm296
            %vm301 = vmand %vm266, %vm296
            %vm302 = vmand %vm267, %vm296
            %vm303 = vmand %vm268, %vm296
            %vm304 = vmand %vm269, %vm296
            %vm305 = vmand %vm270, %vm296
            %vm306 = vmand %vm271, %vm296
            %vm307 = vmand %vm272, %vm296
            %vm308 = vmand %vm273, %vm296
            %vm309 = vmand %vm274, %vm296
            %vm310 = vmand %vm275, %vm296
            %vm311 = vmand %vm276, %vm296
            %vm312 = vmand %vm277, %vm296
            %vm313 = vmand %vm278, %vm296
            %vm314 = vmand %vm279, %vm296
            %vm315 = vmand %vm280, %vm296
            %vm316 = vmand %vm281, %vm296
            %vm317 = vmand %vm282, %vm296
            %vm318 = vmand %vm283, %vm296
            %vm319 = vmand %vm284, %vm296
            %vm320 = vmand %vm285, %vm296
            %vm321 = vmand %vm286, %vm296
            %vm322 = vmand %vm287, %vm296
            %vm323 = vmand %vm288, %vm296
            %vm324 = vmand %vm289, %vm296
            %vm325 = vmand %vm290, %vm296
            %vm326 = vmand %vm291, %vm296
            %vm327 = vmand %vm292, %vm296
            %vm328 = vmand %vm293, %vm296
            %v329 = vsel %vm297, 1, 0
            %v330 = vsel %vm298, 1, 0
            %v331 = vsel %vm299, 1, 0
            %v332 = vsel %vm300, 1, 0
            %v333 = vsel %vm301, 1, 0
            %v334 = vsel %vm302, 1, 0
            %v335 = vsel %vm303, 1, 0
            %v336 = vsel %vm304, 1, 0
            %v337 = vsel %vm305, 1, 0
            %v338 = vsel %vm306, 1, 0
            %v339 = vsel %vm307, 1, 0
            %v340 = vsel %vm308, 1, 0
            %v341 = vsel %vm309, 1, 0
            %v342 = vsel %vm310, 1, 0
            %v343 = vsel %vm311, 1, 0
            %v344 = vsel %vm312, 1, 0
            %v345 = vsel %vm313, 1, 0
            %v346 = vsel %vm314, 1, 0
            %v347 = vsel %vm315, 1, 0
            %v348 = vsel %vm316, 1, 0
            %v349 = vsel %vm317, 1, 0
            %v350 = vsel %vm318, 1, 0
            %v351 = vsel %vm319, 1, 0
            %v352 = vsel %vm320, 1, 0
            %v353 = vsel %vm321, 1, 0
            %v354 = vsel %vm322, 1, 0
            %v355 = vsel %vm323, 1, 0
            %v356 = vsel %vm324, 1, 0
            %v357 = vsel %vm325, 1, 0
            %v358 = vsel %vm326, 1, 0
            %v359 = vsel %vm327, 1, 0
            %v360 = vsel %vm328, 1, 0
            %v361 = vcvt.s32.f32 %v329
            %v362 = vcvt.s32.f32 %v330
            %v363 = vcvt.s32.f32 %v331
            %v364 = vcvt.s32.f32 %v332
            %v365 = vcvt.s32.f32 %v333
            %v366 = vcvt.s32.f32 %v334
            %v367 = vcvt.s32.f32 %v335
            %v368 = vcvt.s32.f32 %v336
            %v369 = vcvt.s32.f32 %v337
            %v370 = vcvt.s32.f32 %v338
            %v371 = vcvt.s32.f32 %v339
            %v372 = vcvt.s32.f32 %v340
            %v373 = vcvt.s32.f32 %v341
            %v374 = vcvt.s32.f32 %v342
            %v375 = vcvt.s32.f32 %v343
            %v376 = vcvt.s32.f32 %v344
            %v377 = vcvt.s32.f32 %v345
            %v378 = vcvt.s32.f32 %v346
            %v379 = vcvt.s32.f32 %v347
            %v380 = vcvt.s32.f32 %v348
            %v381 = vcvt.s32.f32 %v349
            %v382 = vcvt.s32.f32 %v350
            %v383 = vcvt.s32.f32 %v351
            %v384 = vcvt.s32.f32 %v352
            %v385 = vcvt.s32.f32 %v353
            %v386 = vcvt.s32.f32 %v354
            %v387 = vcvt.s32.f32 %v355
            %v388 = vcvt.s32.f32 %v356
            %v389 = vcvt.s32.f32 %v357
            %v390 = vcvt.s32.f32 %v358
            %v391 = vcvt.s32.f32 %v359
            %v392 = vcvt.s32.f32 %v360
            %v393 = vld [vmem:[#allocation2] sm:$0xff]
            %v394 = vld [vmem:[#allocation2 + $0x8] sm:$0xff]
            %v395 = vld [vmem:[#allocation2 + $0x10] sm:$0xff]
            %v396 = vld [vmem:[#allocation2 + $0x18] sm:$0xff]
            %v397 = vld [vmem:[#allocation2 + $0x20] sm:$0xff]
            %v398 = vld [vmem:[#allocation2 + $0x28] sm:$0xff]
            %v399 = vld [vmem:[#allocation2 + $0x30] sm:$0xff]
            %v400 = vld [vmem:[#allocation2 + $0x38] sm:$0xff]
            %v401 = vld [vmem:[#allocation2 + $0x40] sm:$0xff]
            %v402 = vld [vmem:[#allocation2 + $0x48] sm:$0xff]
            %v403 = vld [vmem:[#allocation2 + $0x50] sm:$0xff]
            %v404 = vld [vmem:[#allocation2 + $0x58] sm:$0xff]
            %v405 = vld [vmem:[#allocation2 + $0x60] sm:$0xff]
            %v406 = vld [vmem:[#allocation2 + $0x68] sm:$0xff]
            %v407 = vld [vmem:[#allocation2 + $0x70] sm:$0xff]
            %v408 = vld [vmem:[#allocation2 + $0x78] sm:$0xff]
            %v409 = vld [vmem:[#allocation2 + $0x80] sm:$0xff]
            %v410 = vld [vmem:[#allocation2 + $0x88] sm:$0xff]
            %v411 = vld [vmem:[#allocation2 + $0x90] sm:$0xff]
            %v412 = vld [vmem:[#allocation2 + $0x98] sm:$0xff]
            %v413 = vld [vmem:[#allocation2 + $0xa0] sm:$0xff]
            %v414 = vld [vmem:[#allocation2 + $0xa8] sm:$0xff]
            %v415 = vld [vmem:[#allocation2 + $0xb0] sm:$0xff]
            %v416 = vld [vmem:[#allocation2 + $0xb8] sm:$0xff]
            %v417 = vld [vmem:[#allocation2 + $0xc0] sm:$0xff]
            %v418 = vld [vmem:[#allocation2 + $0xc8] sm:$0xff]
            %v419 = vld [vmem:[#allocation2 + $0xd0] sm:$0xff]
            %v420 = vld [vmem:[#allocation2 + $0xd8] sm:$0xff]
            %v421 = vld [vmem:[#allocation2 + $0xe0] sm:$0xff]
            %v422 = vld [vmem:[#allocation2 + $0xe8] sm:$0xff]
            %v423 = vld [vmem:[#allocation2 + $0xf0] sm:$0xff]
            %v424 = vld [vmem:[#allocation2 + $0xf8] sm:$0xff]
            %v425 = vadd.f32 %v393, %v361
            %v426 = vadd.f32 %v394, %v362
            %v427 = vadd.f32 %v395, %v363
            %v428 = vadd.f32 %v396, %v364
            %v429 = vadd.f32 %v397, %v365
            %v430 = vadd.f32 %v398, %v366
            %v431 = vadd.f32 %v399, %v367
            %v432 = vadd.f32 %v400, %v368
            %v433 = vadd.f32 %v401, %v369
            %v434 = vadd.f32 %v402, %v370
            %v435 = vadd.f32 %v403, %v371
            %v436 = vadd.f32 %v404, %v372
            %v437 = vadd.f32 %v405, %v373
            %v438 = vadd.f32 %v406, %v374
            %v439 = vadd.f32 %v407, %v375
            %v440 = vadd.f32 %v408, %v376
            %v441 = vadd.f32 %v409, %v377
            %v442 = vadd.f32 %v410, %v378
            %v443 = vadd.f32 %v411, %v379
            %v444 = vadd.f32 %v412, %v380
            %v445 = vadd.f32 %v413, %v381
            %v446 = vadd.f32 %v414, %v382
            %v447 = vadd.f32 %v415, %v383
            %v448 = vadd.f32 %v416, %v384
            %v449 = vadd.f32 %v417, %v385
            %v450 = vadd.f32 %v418, %v386
            %v451 = vadd.f32 %v419, %v387
            %v452 = vadd.f32 %v420, %v388
            %v453 = vadd.f32 %v421, %v389
            %v454 = vadd.f32 %v422, %v390
            %v455 = vadd.f32 %v423, %v391
            %v456 = vadd.f32 %v424, %v392
            %457 = vst [vmem:[#allocation2] sm:$0xff] %v425
            %458 = vst [vmem:[#allocation2 + $0x8] sm:$0xff] %v426
            %459 = vst [vmem:[#allocation2 + $0x10] sm:$0xff] %v427
            %460 = vst [vmem:[#allocation2 + $0x18] sm:$0xff] %v428
            %461 = vst [vmem:[#allocation2 + $0x20] sm:$0xff] %v429
            %462 = vst [vmem:[#allocation2 + $0x28] sm:$0xff] %v430
            %463 = vst [vmem:[#allocation2 + $0x30] sm:$0xff] %v431
            %464 = vst [vmem:[#allocation2 + $0x38] sm:$0xff] %v432
            %465 = vst [vmem:[#allocation2 + $0x40] sm:$0xff] %v433
            %466 = vst [vmem:[#allocation2 + $0x48] sm:$0xff] %v434
            %467 = vst [vmem:[#allocation2 + $0x50] sm:$0xff] %v435
            %468 = vst [vmem:[#allocation2 + $0x58] sm:$0xff] %v436
            %469 = vst [vmem:[#allocation2 + $0x60] sm:$0xff] %v437
            %470 = vst [vmem:[#allocation2 + $0x68] sm:$0xff] %v438
            %471 = vst [vmem:[#allocation2 + $0x70] sm:$0xff] %v439
            %472 = vst [vmem:[#allocation2 + $0x78] sm:$0xff] %v440
            %473 = vst [vmem:[#allocation2 + $0x80] sm:$0xff] %v441
            %474 = vst [vmem:[#allocation2 + $0x88] sm:$0xff] %v442
            %475 = vst [vmem:[#allocation2 + $0x90] sm:$0xff] %v443
            %476 = vst [vmem:[#allocation2 + $0x98] sm:$0xff] %v444
            %477 = vst [vmem:[#allocation2 + $0xa0] sm:$0xff] %v445
            %478 = vst [vmem:[#allocation2 + $0xa8] sm:$0xff] %v446
            %479 = vst [vmem:[#allocation2 + $0xb0] sm:$0xff] %v447
            %480 = vst [vmem:[#allocation2 + $0xb8] sm:$0xff] %v448
            %481 = vst [vmem:[#allocation2 + $0xc0] sm:$0xff] %v449
            %482 = vst [vmem:[#allocation2 + $0xc8] sm:$0xff] %v450
            %483 = vst [vmem:[#allocation2 + $0xd0] sm:$0xff] %v451
            %484 = vst [vmem:[#allocation2 + $0xd8] sm:$0xff] %v452
            %485 = vst [vmem:[#allocation2 + $0xe0] sm:$0xff] %v453
            %486 = vst [vmem:[#allocation2 + $0xe8] sm:$0xff] %v454
            %487 = vst [vmem:[#allocation2 + $0xf0] sm:$0xff] %v455
            %488 = vst [vmem:[#allocation2 + $0xf8] sm:$0xff] %v456
          $region41: #{tpu_custom_call.1} parent=35 // loop_footer
            %s251 = sadd.s32 1, %s247
          $region42: #{tpu_custom_call.1} parent=35 // loop_footer_branch
            %246 = sbr.rel target = $region38
          $region43: #{tpu_custom_call.1} parent=35 // loop_exit
            _
        $region36: #{tpu_custom_call.1} parent=23 // pred_fallthru
          _
        %p489 = scmp.eq.s32.totalorder %s24, 1
        %p490 = pnand %p489, %p195
        %p491 = pneg %p490
        // Predicated region
        $region44: #{tpu_custom_call.1} parent=23 // pred_check
          _
        $region45: #{tpu_custom_call.1} parent=23 // pred_check_branch
          %493 = sbr.rel (%p490) target = $region47
        $region46: #{tpu_custom_call.1} parent=23 // pred_region
          %v494 = vld [vmem:[#allocation2] sm:$0xff]
          %v495 = vld [vmem:[#allocation2 + $0x8] sm:$0xff]
          %v496 = vld [vmem:[#allocation2 + $0x10] sm:$0xff]
          %v497 = vld [vmem:[#allocation2 + $0x18] sm:$0xff]
          %v498 = vld [vmem:[#allocation2 + $0x20] sm:$0xff]
          %v499 = vld [vmem:[#allocation2 + $0x28] sm:$0xff]
          %v500 = vld [vmem:[#allocation2 + $0x30] sm:$0xff]
          %v501 = vld [vmem:[#allocation2 + $0x38] sm:$0xff]
          %v502 = vld [vmem:[#allocation2 + $0x40] sm:$0xff]
          %v503 = vld [vmem:[#allocation2 + $0x48] sm:$0xff]
          %v504 = vld [vmem:[#allocation2 + $0x50] sm:$0xff]
          %v505 = vld [vmem:[#allocation2 + $0x58] sm:$0xff]
          %v506 = vld [vmem:[#allocation2 + $0x60] sm:$0xff]
          %v507 = vld [vmem:[#allocation2 + $0x68] sm:$0xff]
          %v508 = vld [vmem:[#allocation2 + $0x70] sm:$0xff]
          %v509 = vld [vmem:[#allocation2 + $0x78] sm:$0xff]
          %v510 = vld [vmem:[#allocation2 + $0x80] sm:$0xff]
          %v511 = vld [vmem:[#allocation2 + $0x88] sm:$0xff]
          %v512 = vld [vmem:[#allocation2 + $0x90] sm:$0xff]
          %v513 = vld [vmem:[#allocation2 + $0x98] sm:$0xff]
          %v514 = vld [vmem:[#allocation2 + $0xa0] sm:$0xff]
          %v515 = vld [vmem:[#allocation2 + $0xa8] sm:$0xff]
          %v516 = vld [vmem:[#allocation2 + $0xb0] sm:$0xff]
          %v517 = vld [vmem:[#allocation2 + $0xb8] sm:$0xff]
          %v518 = vld [vmem:[#allocation2 + $0xc0] sm:$0xff]
          %v519 = vld [vmem:[#allocation2 + $0xc8] sm:$0xff]
          %v520 = vld [vmem:[#allocation2 + $0xd0] sm:$0xff]
          %v521 = vld [vmem:[#allocation2 + $0xd8] sm:$0xff]
          %v522 = vld [vmem:[#allocation2 + $0xe0] sm:$0xff]
          %v523 = vld [vmem:[#allocation2 + $0xe8] sm:$0xff]
          %v524 = vld [vmem:[#allocation2 + $0xf0] sm:$0xff]
          %v525 = vld [vmem:[#allocation2 + $0xf8] sm:$0xff]
          %526 = vmatpush.xpose.msra.mxu0 %v509
          %527 = vmatpush.xpose.msra.mxu0 %v508
          %528 = vmatpush.xpose.msra.mxu0 %v507
          %529 = vmatpush.xpose.msra.mxu0 %v506
          %530 = vmatpush.xpose.msra.mxu0 %v505
          %531 = vmatpush.xpose.msra.mxu0 %v504
          %532 = vmatpush.xpose.msra.mxu0 %v503
          %533 = vmatpush.xpose.msra.mxu0 %v502
          %534 = vmatpush.xpose.msra.mxu0 %v501
          %535 = vmatpush.xpose.msra.mxu0 %v500
          %536 = vmatpush.xpose.msra.mxu0 %v499
          %537 = vmatpush.xpose.msra.mxu0 %v498
          %538 = vmatpush.xpose.msra.mxu0 %v497
          %539 = vmatpush.xpose.msra.mxu0 %v496
          %540 = vmatpush.xpose.msra.mxu0 %v495
          %541 = vmatpush.xpose.msra.mxu0 %v494
          %542 = vmatmul.f32.gmra.mxu0 1.0
          %v543 = vpop.f32.mrf.mxu0
          %v544 = vadd.f32 0.0, %v543
          %545 = vdwg.mxu0
          %546 = vmatpush.xpose.msra.mxu0 %v525
          %547 = vmatpush.xpose.msra.mxu0 %v524
          %548 = vmatpush.xpose.msra.mxu0 %v523
          %549 = vmatpush.xpose.msra.mxu0 %v522
          %550 = vmatpush.xpose.msra.mxu0 %v521
          %551 = vmatpush.xpose.msra.mxu0 %v520
          %552 = vmatpush.xpose.msra.mxu0 %v519
          %553 = vmatpush.xpose.msra.mxu0 %v518
          %554 = vmatpush.xpose.msra.mxu0 %v517
          %555 = vmatpush.xpose.msra.mxu0 %v516
          %556 = vmatpush.xpose.msra.mxu0 %v515
          %557 = vmatpush.xpose.msra.mxu0 %v514
          %558 = vmatpush.xpose.msra.mxu0 %v513
          %559 = vmatpush.xpose.msra.mxu0 %v512
          %560 = vmatpush.xpose.msra.mxu0 %v511
          %561 = vmatpush.xpose.msra.mxu0 %v510
          %562 = vmatmul.f32.gmra.mxu0 1.0
          %v563 = vpop.f32.mrf.mxu0
          %v564 = vadd.f32 0.0, %v563
          %565 = vdwg.mxu0
          %vm566 = vcmask 1040384
          %v567 = vsel %vm566, %v544, -inf
          %v568 = vsel %vm566, %v564, -inf
          %v569 = vmax.f32 %v567, %v568
          %570 = vmax.xlane.f32.xlu0 %v569
          %v571 = vpop.xlane.xlu0 %570
          %v572 = vrot.slane %v571, 4
          %v573 = vmax.f32 %v571, %v572
          %v574 = vrot.slane %v573, 2
          %v575 = vmax.f32 %v573, %v574
          %v576 = vrot.slane %v575, 1
          %v577 = vmax.f32 %v575, %v576
          %s578 = vtos %v577
          %v579 = vld [vmem:[#allocation4] sm:$0x1]
          %v580 = vsel %vm566, %v579, -inf
          %581 = vmax.xlane.f32.xlu0 %v580
          %v582 = vpop.xlane.xlu0 %581
          %v583 = vrot.slane %v582, 4
          %v584 = vmax.f32 %v582, %v583
          %v585 = vrot.slane %v584, 2
          %v586 = vmax.f32 %v584, %v585
          %v587 = vrot.slane %v586, 1
          %v588 = vmax.f32 %v586, %v587
          %s589 = vtos %v588
          %s590 = smax.f32 %s578, 1.0
          %v591 = vstv %s590
          %v592 = vrcp.pop %v591
          %v593 = vmul.f32 %v591, %v592
          %v594 = vsub.f32 1.0, %v593
          %v595 = vmul.f32 %v592, %v594
          %v596 = vadd.f32 %v592, %v595
          %vm597 = vweird.f32 %v591
          %vm598 = vweird.f32 %v592
          %vm599 = vmor %vm597, %vm598
          %v600 = vsel %vm599, %v592, %v596
          %v601 = vand.u32 2147483647, %v591
          %vm602 = vcmp.eq.f32.partialorder %v601, 8.507059e+37
          %v603 = vand.u32 %v591, 2147483648
          %v604 = vor.u32 1.1754944e-38, %v603
          %v605 = vsel %vm602, %v604, %v600
          %s606 = vtos %v605
          %s607 = smul.f32 %s589, %s606
          %v608 = vstv %s607
          %v609 = vmul.f32 %v544, %v608
          %v610 = vmul.f32 %v564, %v608
          %v611 = vlaneseq
          %v612 = vand.u32 %v611, 127
          %v613 = vadd.s32 %v612, 128
          %v614 = vadd.s32 %v612, 1
          %v615 = vadd.s32 %v613, 1
          %vm616 = vcmp.eq.s32.totalorder %v162, %v614
          %vm617 = vcmp.eq.s32.totalorder %v162, %v615
          %vm618 = vcmp.eq.s32.totalorder %v163, %v614
          %vm619 = vcmp.eq.s32.totalorder %v163, %v615
          %vm620 = vcmp.eq.s32.totalorder %v164, %v614
          %vm621 = vcmp.eq.s32.totalorder %v164, %v615
          %vm622 = vcmp.eq.s32.totalorder %v165, %v614
          %vm623 = vcmp.eq.s32.totalorder %v165, %v615
          %vm624 = vcmp.eq.s32.totalorder %v166, %v614
          %vm625 = vcmp.eq.s32.totalorder %v166, %v615
          %vm626 = vcmp.eq.s32.totalorder %v167, %v614
          %vm627 = vcmp.eq.s32.totalorder %v167, %v615
          %vm628 = vcmp.eq.s32.totalorder %v168, %v614
          %vm629 = vcmp.eq.s32.totalorder %v168, %v615
          %vm630 = vcmp.eq.s32.totalorder %v169, %v614
          %vm631 = vcmp.eq.s32.totalorder %v169, %v615
          %vm632 = vcmp.eq.s32.totalorder %v170, %v614
          %vm633 = vcmp.eq.s32.totalorder %v170, %v615
          %vm634 = vcmp.eq.s32.totalorder %v171, %v614
          %vm635 = vcmp.eq.s32.totalorder %v171, %v615
          %vm636 = vcmp.eq.s32.totalorder %v172, %v614
          %vm637 = vcmp.eq.s32.totalorder %v172, %v615
          %vm638 = vcmp.eq.s32.totalorder %v173, %v614
          %vm639 = vcmp.eq.s32.totalorder %v173, %v615
          %vm640 = vcmp.eq.s32.totalorder %v174, %v614
          %vm641 = vcmp.eq.s32.totalorder %v174, %v615
          %vm642 = vcmp.eq.s32.totalorder %v175, %v614
          %vm643 = vcmp.eq.s32.totalorder %v175, %v615
          %vm644 = vcmp.eq.s32.totalorder %v176, %v614
          %vm645 = vcmp.eq.s32.totalorder %v176, %v615
          %vm646 = vcmp.eq.s32.totalorder %v177, %v614
          %vm647 = vcmp.eq.s32.totalorder %v177, %v615
          %vm648 = vcmp.eq.s32.totalorder %v178, %v614
          %vm649 = vcmp.eq.s32.totalorder %v178, %v615
          %vm650 = vcmp.eq.s32.totalorder %v179, %v614
          %vm651 = vcmp.eq.s32.totalorder %v179, %v615
          %vm652 = vcmp.eq.s32.totalorder %v180, %v614
          %vm653 = vcmp.eq.s32.totalorder %v180, %v615
          %vm654 = vcmp.eq.s32.totalorder %v181, %v614
          %vm655 = vcmp.eq.s32.totalorder %v181, %v615
          %vm656 = vcmp.eq.s32.totalorder %v182, %v614
          %vm657 = vcmp.eq.s32.totalorder %v182, %v615
          %vm658 = vcmp.eq.s32.totalorder %v183, %v614
          %vm659 = vcmp.eq.s32.totalorder %v183, %v615
          %vm660 = vcmp.eq.s32.totalorder %v184, %v614
          %vm661 = vcmp.eq.s32.totalorder %v184, %v615
          %vm662 = vcmp.eq.s32.totalorder %v185, %v614
          %vm663 = vcmp.eq.s32.totalorder %v185, %v615
          %vm664 = vcmp.eq.s32.totalorder %v186, %v614
          %vm665 = vcmp.eq.s32.totalorder %v186, %v615
          %vm666 = vcmp.eq.s32.totalorder %v187, %v614
          %vm667 = vcmp.eq.s32.totalorder %v187, %v615
          %vm668 = vcmp.eq.s32.totalorder %v188, %v614
          %vm669 = vcmp.eq.s32.totalorder %v188, %v615
          %vm670 = vcmp.eq.s32.totalorder %v189, %v614
          %vm671 = vcmp.eq.s32.totalorder %v189, %v615
          %vm672 = vcmp.eq.s32.totalorder %v190, %v614
          %vm673 = vcmp.eq.s32.totalorder %v190, %v615
          %vm674 = vcmp.eq.s32.totalorder %v191, %v614
          %vm675 = vcmp.eq.s32.totalorder %v191, %v615
          %vm676 = vcmp.eq.s32.totalorder %v192, %v614
          %vm677 = vcmp.eq.s32.totalorder %v192, %v615
          %vm678 = vcmp.eq.s32.totalorder %v193, %v614
          %vm679 = vcmp.eq.s32.totalorder %v193, %v615
          %vm680 = vcmp.eq.s32.totalorder %v162, 255
          %vm681 = vcmp.eq.s32.totalorder %v163, 255
          %vm682 = vcmp.eq.s32.totalorder %v164, 255
          %vm683 = vcmp.eq.s32.totalorder %v165, 255
          %vm684 = vcmp.eq.s32.totalorder %v166, 255
          %vm685 = vcmp.eq.s32.totalorder %v167, 255
          %vm686 = vcmp.eq.s32.totalorder %v168, 255
          %vm687 = vcmp.eq.s32.totalorder %v169, 255
          %vm688 = vcmp.eq.s32.totalorder %v170, 255
          %vm689 = vcmp.eq.s32.totalorder %v171, 255
          %vm690 = vcmp.eq.s32.totalorder %v172, 255
          %vm691 = vcmp.eq.s32.totalorder %v173, 255
          %vm692 = vcmp.eq.s32.totalorder %v174, 255
          %vm693 = vcmp.eq.s32.totalorder %v175, 255
          %vm694 = vcmp.eq.s32.totalorder %v176, 255
          %vm695 = vcmp.eq.s32.totalorder %v177, 255
          %vm696 = vcmp.eq.s32.totalorder %v178, 255
          %vm697 = vcmp.eq.s32.totalorder %v179, 255
          %vm698 = vcmp.eq.s32.totalorder %v180, 255
          %vm699 = vcmp.eq.s32.totalorder %v181, 255
          %vm700 = vcmp.eq.s32.totalorder %v182, 255
          %vm701 = vcmp.eq.s32.totalorder %v183, 255
          %vm702 = vcmp.eq.s32.totalorder %v184, 255
          %vm703 = vcmp.eq.s32.totalorder %v185, 255
          %vm704 = vcmp.eq.s32.totalorder %v186, 255
          %vm705 = vcmp.eq.s32.totalorder %v187, 255
          %vm706 = vcmp.eq.s32.totalorder %v188, 255
          %vm707 = vcmp.eq.s32.totalorder %v189, 255
          %vm708 = vcmp.eq.s32.totalorder %v190, 255
          %vm709 = vcmp.eq.s32.totalorder %v191, 255
          %vm710 = vcmp.eq.s32.totalorder %v192, 255
          %vm711 = vcmp.eq.s32.totalorder %v193, 255
          %vm712 = vcmp.eq.s32.totalorder %v612, 255
          %vm713 = vcmp.eq.s32.totalorder %v613, 255
          %vm714 = vmand %vm680, %vm712
          %vm715 = vmand %vm680, %vm713
          %vm716 = vmand %vm681, %vm712
          %vm717 = vmand %vm681, %vm713
          %vm718 = vmand %vm682, %vm712
          %vm719 = vmand %vm682, %vm713
          %vm720 = vmand %vm683, %vm712
          %vm721 = vmand %vm683, %vm713
          %vm722 = vmand %vm684, %vm712
          %vm723 = vmand %vm684, %vm713
          %vm724 = vmand %vm685, %vm712
          %vm725 = vmand %vm685, %vm713
          %vm726 = vmand %vm686, %vm712
          %vm727 = vmand %vm686, %vm713
          %vm728 = vmand %vm687, %vm712
          %vm729 = vmand %vm687, %vm713
          %vm730 = vmand %vm688, %vm712
          %vm731 = vmand %vm688, %vm713
          %vm732 = vmand %vm689, %vm712
          %vm733 = vmand %vm689, %vm713
          %vm734 = vmand %vm690, %vm712
          %vm735 = vmand %vm690, %vm713
          %vm736 = vmand %vm691, %vm712
          %vm737 = vmand %vm691, %vm713
          %vm738 = vmand %vm692, %vm712
          %vm739 = vmand %vm692, %vm713
          %vm740 = vmand %vm693, %vm712
          %vm741 = vmand %vm693, %vm713
          %vm742 = vmand %vm694, %vm712
          %vm743 = vmand %vm694, %vm713
          %vm744 = vmand %vm695, %vm712
          %vm745 = vmand %vm695, %vm713
          %vm746 = vmand %vm696, %vm712
          %vm747 = vmand %vm696, %vm713
          %vm748 = vmand %vm697, %vm712
          %vm749 = vmand %vm697, %vm713
          %vm750 = vmand %vm698, %vm712
          %vm751 = vmand %vm698, %vm713
          %vm752 = vmand %vm699, %vm712
          %vm753 = vmand %vm699, %vm713
          %vm754 = vmand %vm700, %vm712
          %vm755 = vmand %vm700, %vm713
          %vm756 = vmand %vm701, %vm712
          %vm757 = vmand %vm701, %vm713
          %vm758 = vmand %vm702, %vm712
          %vm759 = vmand %vm702, %vm713
          %vm760 = vmand %vm703, %vm712
          %vm761 = vmand %vm703, %vm713
          %vm762 = vmand %vm704, %vm712
          %vm763 = vmand %vm704, %vm713
          %vm764 = vmand %vm705, %vm712
          %vm765 = vmand %vm705, %vm713
          %vm766 = vmand %vm706, %vm712
          %vm767 = vmand %vm706, %vm713
          %vm768 = vmand %vm707, %vm712
          %vm769 = vmand %vm707, %vm713
          %vm770 = vmand %vm708, %vm712
          %vm771 = vmand %vm708, %vm713
          %vm772 = vmand %vm709, %vm712
          %vm773 = vmand %vm709, %vm713
          %vm774 = vmand %vm710, %vm712
          %vm775 = vmand %vm710, %vm713
          %vm776 = vmand %vm711, %vm712
          %vm777 = vmand %vm711, %vm713
          %vm778 = vmor %vm616, %vm714
          %vm779 = vmor %vm617, %vm715
          %vm780 = vmor %vm618, %vm716
          %vm781 = vmor %vm619, %vm717
          %vm782 = vmor %vm620, %vm718
          %vm783 = vmor %vm621, %vm719
          %vm784 = vmor %vm622, %vm720
          %vm785 = vmor %vm623, %vm721
          %vm786 = vmor %vm624, %vm722
          %vm787 = vmor %vm625, %vm723
          %vm788 = vmor %vm626, %vm724
          %vm789 = vmor %vm627, %vm725
          %vm790 = vmor %vm628, %vm726
          %vm791 = vmor %vm629, %vm727
          %vm792 = vmor %vm630, %vm728
          %vm793 = vmor %vm631, %vm729
          %vm794 = vmor %vm632, %vm730
          %vm795 = vmor %vm633, %vm731
          %vm796 = vmor %vm634, %vm732
          %vm797 = vmor %vm635, %vm733
          %vm798 = vmor %vm636, %vm734
          %vm799 = vmor %vm637, %vm735
          %vm800 = vmor %vm638, %vm736
          %vm801 = vmor %vm639, %vm737
          %vm802 = vmor %vm640, %vm738
          %vm803 = vmor %vm641, %vm739
          %vm804 = vmor %vm642, %vm740
          %vm805 = vmor %vm643, %vm741
          %vm806 = vmor %vm644, %vm742
          %vm807 = vmor %vm645, %vm743
          %vm808 = vmor %vm646, %vm744
          %vm809 = vmor %vm647, %vm745
          %vm810 = vmor %vm648, %vm746
          %vm811 = vmor %vm649, %vm747
          %vm812 = vmor %vm650, %vm748
          %vm813 = vmor %vm651, %vm749
          %vm814 = vmor %vm652, %vm750
          %vm815 = vmor %vm653, %vm751
          %vm816 = vmor %vm654, %vm752
          %vm817 = vmor %vm655, %vm753
          %vm818 = vmor %vm656, %vm754
          %vm819 = vmor %vm657, %vm755
          %vm820 = vmor %vm658, %vm756
          %vm821 = vmor %vm659, %vm757
          %vm822 = vmor %vm660, %vm758
          %vm823 = vmor %vm661, %vm759
          %vm824 = vmor %vm662, %vm760
          %vm825 = vmor %vm663, %vm761
          %vm826 = vmor %vm664, %vm762
          %vm827 = vmor %vm665, %vm763
          %vm828 = vmor %vm666, %vm764
          %vm829 = vmor %vm667, %vm765
          %vm830 = vmor %vm668, %vm766
          %vm831 = vmor %vm669, %vm767
          %vm832 = vmor %vm670, %vm768
          %vm833 = vmor %vm671, %vm769
          %vm834 = vmor %vm672, %vm770
          %vm835 = vmor %vm673, %vm771
          %vm836 = vmor %vm674, %vm772
          %vm837 = vmor %vm675, %vm773
          %vm838 = vmor %vm676, %vm774
          %vm839 = vmor %vm677, %vm775
          %vm840 = vmor %vm678, %vm776
          %vm841 = vmor %vm679, %vm777
          %v842 = vsel %vm778, 1, 0
          %v843 = vsel %vm779, 1, 0
          %v844 = vsel %vm780, 1, 0
          %v845 = vsel %vm781, 1, 0
          %v846 = vsel %vm782, 1, 0
          %v847 = vsel %vm783, 1, 0
          %v848 = vsel %vm784, 1, 0
          %v849 = vsel %vm785, 1, 0
          %v850 = vsel %vm786, 1, 0
          %v851 = vsel %vm787, 1, 0
          %v852 = vsel %vm788, 1, 0
          %v853 = vsel %vm789, 1, 0
          %v854 = vsel %vm790, 1, 0
          %v855 = vsel %vm791, 1, 0
          %v856 = vsel %vm792, 1, 0
          %v857 = vsel %vm793, 1, 0
          %v858 = vsel %vm794, 1, 0
          %v859 = vsel %vm795, 1, 0
          %v860 = vsel %vm796, 1, 0
          %v861 = vsel %vm797, 1, 0
          %v862 = vsel %vm798, 1, 0
          %v863 = vsel %vm799, 1, 0
          %v864 = vsel %vm800, 1, 0
          %v865 = vsel %vm801, 1, 0
          %v866 = vsel %vm802, 1, 0
          %v867 = vsel %vm803, 1, 0
          %v868 = vsel %vm804, 1, 0
          %v869 = vsel %vm805, 1, 0
          %v870 = vsel %vm806, 1, 0
          %v871 = vsel %vm807, 1, 0
          %v872 = vsel %vm808, 1, 0
          %v873 = vsel %vm809, 1, 0
          %v874 = vsel %vm810, 1, 0
          %v875 = vsel %vm811, 1, 0
          %v876 = vsel %vm812, 1, 0
          %v877 = vsel %vm813, 1, 0
          %v878 = vsel %vm814, 1, 0
          %v879 = vsel %vm815, 1, 0
          %v880 = vsel %vm816, 1, 0
          %v881 = vsel %vm817, 1, 0
          %v882 = vsel %vm818, 1, 0
          %v883 = vsel %vm819, 1, 0
          %v884 = vsel %vm820, 1, 0
          %v885 = vsel %vm821, 1, 0
          %v886 = vsel %vm822, 1, 0
          %v887 = vsel %vm823, 1, 0
          %v888 = vsel %vm824, 1, 0
          %v889 = vsel %vm825, 1, 0
          %v890 = vsel %vm826, 1, 0
          %v891 = vsel %vm827, 1, 0
          %v892 = vsel %vm828, 1, 0
          %v893 = vsel %vm829, 1, 0
          %v894 = vsel %vm830, 1, 0
          %v895 = vsel %vm831, 1, 0
          %v896 = vsel %vm832, 1, 0
          %v897 = vsel %vm833, 1, 0
          %v898 = vsel %vm834, 1, 0
          %v899 = vsel %vm835, 1, 0
          %v900 = vsel %vm836, 1, 0
          %v901 = vsel %vm837, 1, 0
          %v902 = vsel %vm838, 1, 0
          %v903 = vsel %vm839, 1, 0
          %v904 = vsel %vm840, 1, 0
          %v905 = vsel %vm841, 1, 0
          %v906 = vcvt.s32.f32 %v842
          %v907 = vcvt.s32.f32 %v843
          %v908 = vcvt.s32.f32 %v844
          %v909 = vcvt.s32.f32 %v845
          %v910 = vcvt.s32.f32 %v846
          %v911 = vcvt.s32.f32 %v847
          %v912 = vcvt.s32.f32 %v848
          %v913 = vcvt.s32.f32 %v849
          %v914 = vcvt.s32.f32 %v850
          %v915 = vcvt.s32.f32 %v851
          %v916 = vcvt.s32.f32 %v852
          %v917 = vcvt.s32.f32 %v853
          %v918 = vcvt.s32.f32 %v854
          %v919 = vcvt.s32.f32 %v855
          %v920 = vcvt.s32.f32 %v856
          %v921 = vcvt.s32.f32 %v857
          %v922 = vcvt.s32.f32 %v858
          %v923 = vcvt.s32.f32 %v859
          %v924 = vcvt.s32.f32 %v860
          %v925 = vcvt.s32.f32 %v861
          %v926 = vcvt.s32.f32 %v862
          %v927 = vcvt.s32.f32 %v863
          %v928 = vcvt.s32.f32 %v864
          %v929 = vcvt.s32.f32 %v865
          %v930 = vcvt.s32.f32 %v866
          %v931 = vcvt.s32.f32 %v867
          %v932 = vcvt.s32.f32 %v868
          %v933 = vcvt.s32.f32 %v869
          %v934 = vcvt.s32.f32 %v870
          %v935 = vcvt.s32.f32 %v871
          %v936 = vcvt.s32.f32 %v872
          %v937 = vcvt.s32.f32 %v873
          %v938 = vcvt.s32.f32 %v874
          %v939 = vcvt.s32.f32 %v875
          %v940 = vcvt.s32.f32 %v876
          %v941 = vcvt.s32.f32 %v877
          %v942 = vcvt.s32.f32 %v878
          %v943 = vcvt.s32.f32 %v879
          %v944 = vcvt.s32.f32 %v880
          %v945 = vcvt.s32.f32 %v881
          %v946 = vcvt.s32.f32 %v882
          %v947 = vcvt.s32.f32 %v883
          %v948 = vcvt.s32.f32 %v884
          %v949 = vcvt.s32.f32 %v885
          %v950 = vcvt.s32.f32 %v886
          %v951 = vcvt.s32.f32 %v887
          %v952 = vcvt.s32.f32 %v888
          %v953 = vcvt.s32.f32 %v889
          %v954 = vcvt.s32.f32 %v890
          %v955 = vcvt.s32.f32 %v891
          %v956 = vcvt.s32.f32 %v892
          %v957 = vcvt.s32.f32 %v893
          %v958 = vcvt.s32.f32 %v894
          %v959 = vcvt.s32.f32 %v895
          %v960 = vcvt.s32.f32 %v896
          %v961 = vcvt.s32.f32 %v897
          %v962 = vcvt.s32.f32 %v898
          %v963 = vcvt.s32.f32 %v899
          %v964 = vcvt.s32.f32 %v900
          %v965 = vcvt.s32.f32 %v901
          %v966 = vcvt.s32.f32 %v902
          %v967 = vcvt.s32.f32 %v903
          %v968 = vcvt.s32.f32 %v904
          %v969 = vcvt.s32.f32 %v905
          %970 = vmatpush.msra.mxu0 %v936
          %971 = vmatpush.msra.mxu0 %v934
          %972 = vmatpush.msra.mxu0 %v932
          %973 = vmatpush.msra.mxu0 %v930
          %974 = vmatpush.msra.mxu0 %v928
          %975 = vmatpush.msra.mxu0 %v926
          %976 = vmatpush.msra.mxu0 %v924
          %977 = vmatpush.msra.mxu0 %v922
          %978 = vmatpush.msra.mxu0 %v920
          %979 = vmatpush.msra.mxu0 %v918
          %980 = vmatpush.msra.mxu0 %v916
          %981 = vmatpush.msra.mxu0 %v914
          %982 = vmatpush.msra.mxu0 %v912
          %983 = vmatpush.msra.mxu0 %v910
          %984 = vmatpush.msra.mxu0 %v908
          %985 = vmatpush.msra.mxu0 %v906
          %986 = vmatmul.f32.gmra.mxu0 %v609
          %v987 = vpop.f32.mrf.mxu0
          %v988 = vadd.f32 0.0, %v987
          %989 = vdwg.mxu0
          %990 = vmatpush.msra.mxu0 %v968
          %991 = vmatpush.msra.mxu0 %v966
          %992 = vmatpush.msra.mxu0 %v964
          %993 = vmatpush.msra.mxu0 %v962
          %994 = vmatpush.msra.mxu0 %v960
          %995 = vmatpush.msra.mxu0 %v958
          %996 = vmatpush.msra.mxu0 %v956
          %997 = vmatpush.msra.mxu0 %v954
          %998 = vmatpush.msra.mxu0 %v952
          %999 = vmatpush.msra.mxu0 %v950
          %1000 = vmatpush.msra.mxu0 %v948
          %1001 = vmatpush.msra.mxu0 %v946
          %1002 = vmatpush.msra.mxu0 %v944
          %1003 = vmatpush.msra.mxu0 %v942
          %1004 = vmatpush.msra.mxu0 %v940
          %1005 = vmatpush.msra.mxu0 %v938
          %1006 = vmatmul.f32.gmra.mxu0 %v610
          %v1007 = vpop.f32.mrf.mxu0
          %v1008 = vadd.f32 %v988, %v1007
          %1009 = vdwg.mxu0
          %1010 = vmatpush.msra.mxu0 %v937
          %1011 = vmatpush.msra.mxu0 %v935
          %1012 = vmatpush.msra.mxu0 %v933
          %1013 = vmatpush.msra.mxu0 %v931
          %1014 = vmatpush.msra.mxu0 %v929
          %1015 = vmatpush.msra.mxu0 %v927
          %1016 = vmatpush.msra.mxu0 %v925
          %1017 = vmatpush.msra.mxu0 %v923
          %1018 = vmatpush.msra.mxu0 %v921
          %1019 = vmatpush.msra.mxu0 %v919
          %1020 = vmatpush.msra.mxu0 %v917
          %1021 = vmatpush.msra.mxu0 %v915
          %1022 = vmatpush.msra.mxu0 %v913
          %1023 = vmatpush.msra.mxu0 %v911
          %1024 = vmatpush.msra.mxu0 %v909
          %1025 = vmatpush.msra.mxu0 %v907
          %1026 = vmatmul.f32.gmra.mxu0 %v609
          %v1027 = vpop.f32.mrf.mxu0
          %v1028 = vadd.f32 0.0, %v1027
          %1029 = vdwg.mxu0
          %1030 = vmatpush.msra.mxu0 %v969
          %1031 = vmatpush.msra.mxu0 %v967
          %1032 = vmatpush.msra.mxu0 %v965
          %1033 = vmatpush.msra.mxu0 %v963
          %1034 = vmatpush.msra.mxu0 %v961
          %1035 = vmatpush.msra.mxu0 %v959
          %1036 = vmatpush.msra.mxu0 %v957
          %1037 = vmatpush.msra.mxu0 %v955
          %1038 = vmatpush.msra.mxu0 %v953
          %1039 = vmatpush.msra.mxu0 %v951
          %1040 = vmatpush.msra.mxu0 %v949
          %1041 = vmatpush.msra.mxu0 %v947
          %1042 = vmatpush.msra.mxu0 %v945
          %1043 = vmatpush.msra.mxu0 %v943
          %1044 = vmatpush.msra.mxu0 %v941
          %1045 = vmatpush.msra.mxu0 %v939
          %1046 = vmatmul.f32.gmra.mxu0 %v610
          %v1047 = vpop.f32.mrf.mxu0
          %v1048 = vadd.f32 %v1028, %v1047
          %1049 = vdwg.mxu0
          %vm1050 = vcmp.eq.s32.totalorder %v162, 0
          %v1051 = vperm.slane %v609, 0
          %v1052 = vperm.slane %v610, 0
          %vm1053 = vcmp.eq.s32.totalorder %v162, 1
          %v1054 = vperm.slane %v1008, 0
          %v1055 = vperm.slane %v1048, 0
          %v1056 = vsel %vm1053, %v1054, 0.0
          %v1057 = vsel %vm1053, %v1055, 0.0
          %v1058 = vsel %vm1050, %v1051, %v1056
          %v1059 = vsel %vm1050, %v1052, %v1057
          %1060 = vst [vmem:[#allocation3] sm:$0xff] %v1058
          %1061 = vst [vmem:[#allocation3 + $0x8] sm:$0xff] %v1059
        $region47: #{tpu_custom_call.1} parent=23 // pred_fallthru
          _
        // Predicated region
        $region48: #{tpu_custom_call.1} parent=23 // pred_check
          %p1062 = pneg %p489
        $region49: #{tpu_custom_call.1} parent=23 // pred_check_branch
          %1064 = sbr.rel (%p1062) target = $region51
        $region50: #{tpu_custom_call.1} parent=23 // pred_region
          %v1065 = vld [vmem:[#allocation3] sm:$0xff]
          %v1066 = vld [vmem:[#allocation3 + $0x8] sm:$0xff]
          loop: start=0, step=1, limit=8
          $region52: #{tpu_custom_call.1} parent=50 // loop_pre_header
            _
          $region53: #{tpu_custom_call.1} parent=50 // loop_header
            %s1068 = sphi 0, %s1072
            %p1069 = scmp.ge.s32.totalorder %s1068, 8
          $region54: #{tpu_custom_call.1} parent=50 // loop_header_branch
            %1071 = sbr.rel (%p1069) target = $region58
          $region55: #{tpu_custom_call.1} parent=50 // loop_body
            %s1073 = scalar_lea.vmem %s140, %s1068 [#allocation5]
            %v1074 = vld [vmem:[%s1073] sm:$0x1]
            %v1075 = vmul.f32 %v1074, 256.0
            %v1076 = vfloor.f32 %v1075
            %v1077 = vmax.f32 %v1076, 0.0
            %v1078 = vmin.f32 %v1077, 255.0
            %v1079 = vsub.f32 %v1075, %v1078
            %v1080 = vmax.f32 %v1079, 0.0
            %v1081 = vmin.f32 %v1080, 1.0
            %v1082 = vcvt.f32.s32.to.zero.pseudo %v1078
            %v1083 = vperm.slane %v1082, 0
            %vm1084 = vcmp.eq.s32.totalorder %v1083, %v162
            %vm1085 = vcmp.eq.s32.totalorder %v1083, %v163
            %vm1086 = vcmp.eq.s32.totalorder %v1083, %v164
            %vm1087 = vcmp.eq.s32.totalorder %v1083, %v165
            %vm1088 = vcmp.eq.s32.totalorder %v1083, %v166
            %vm1089 = vcmp.eq.s32.totalorder %v1083, %v167
            %vm1090 = vcmp.eq.s32.totalorder %v1083, %v168
            %vm1091 = vcmp.eq.s32.totalorder %v1083, %v169
            %vm1092 = vcmp.eq.s32.totalorder %v1083, %v170
            %vm1093 = vcmp.eq.s32.totalorder %v1083, %v171
            %vm1094 = vcmp.eq.s32.totalorder %v1083, %v172
            %vm1095 = vcmp.eq.s32.totalorder %v1083, %v173
            %vm1096 = vcmp.eq.s32.totalorder %v1083, %v174
            %vm1097 = vcmp.eq.s32.totalorder %v1083, %v175
            %vm1098 = vcmp.eq.s32.totalorder %v1083, %v176
            %vm1099 = vcmp.eq.s32.totalorder %v1083, %v177
            %vm1100 = vcmp.eq.s32.totalorder %v1083, %v178
            %vm1101 = vcmp.eq.s32.totalorder %v1083, %v179
            %vm1102 = vcmp.eq.s32.totalorder %v1083, %v180
            %vm1103 = vcmp.eq.s32.totalorder %v1083, %v181
            %vm1104 = vcmp.eq.s32.totalorder %v1083, %v182
            %vm1105 = vcmp.eq.s32.totalorder %v1083, %v183
            %vm1106 = vcmp.eq.s32.totalorder %v1083, %v184
            %vm1107 = vcmp.eq.s32.totalorder %v1083, %v185
            %vm1108 = vcmp.eq.s32.totalorder %v1083, %v186
            %vm1109 = vcmp.eq.s32.totalorder %v1083, %v187
            %vm1110 = vcmp.eq.s32.totalorder %v1083, %v188
            %vm1111 = vcmp.eq.s32.totalorder %v1083, %v189
            %vm1112 = vcmp.eq.s32.totalorder %v1083, %v190
            %vm1113 = vcmp.eq.s32.totalorder %v1083, %v191
            %vm1114 = vcmp.eq.s32.totalorder %v1083, %v192
            %vm1115 = vcmp.eq.s32.totalorder %v1083, %v193
            %v1116 = vsel %vm1084, 1, 0
            %v1117 = vsel %vm1085, 1, 0
            %v1118 = vsel %vm1086, 1, 0
            %v1119 = vsel %vm1087, 1, 0
            %v1120 = vsel %vm1088, 1, 0
            %v1121 = vsel %vm1089, 1, 0
            %v1122 = vsel %vm1090, 1, 0
            %v1123 = vsel %vm1091, 1, 0
            %v1124 = vsel %vm1092, 1, 0
            %v1125 = vsel %vm1093, 1, 0
            %v1126 = vsel %vm1094, 1, 0
            %v1127 = vsel %vm1095, 1, 0
            %v1128 = vsel %vm1096, 1, 0
            %v1129 = vsel %vm1097, 1, 0
            %v1130 = vsel %vm1098, 1, 0
            %v1131 = vsel %vm1099, 1, 0
            %v1132 = vsel %vm1100, 1, 0
            %v1133 = vsel %vm1101, 1, 0
            %v1134 = vsel %vm1102, 1, 0
            %v1135 = vsel %vm1103, 1, 0
            %v1136 = vsel %vm1104, 1, 0
            %v1137 = vsel %vm1105, 1, 0
            %v1138 = vsel %vm1106, 1, 0
            %v1139 = vsel %vm1107, 1, 0
            %v1140 = vsel %vm1108, 1, 0
            %v1141 = vsel %vm1109, 1, 0
            %v1142 = vsel %vm1110, 1, 0
            %v1143 = vsel %vm1111, 1, 0
            %v1144 = vsel %vm1112, 1, 0
            %v1145 = vsel %vm1113, 1, 0
            %v1146 = vsel %vm1114, 1, 0
            %v1147 = vsel %vm1115, 1, 0
            %v1148 = vcvt.s32.f32 %v1116
            %v1149 = vcvt.s32.f32 %v1117
            %v1150 = vcvt.s32.f32 %v1118
            %v1151 = vcvt.s32.f32 %v1119
            %v1152 = vcvt.s32.f32 %v1120
            %v1153 = vcvt.s32.f32 %v1121
            %v1154 = vcvt.s32.f32 %v1122
            %v1155 = vcvt.s32.f32 %v1123
            %v1156 = vcvt.s32.f32 %v1124
            %v1157 = vcvt.s32.f32 %v1125
            %v1158 = vcvt.s32.f32 %v1126
            %v1159 = vcvt.s32.f32 %v1127
            %v1160 = vcvt.s32.f32 %v1128
            %v1161 = vcvt.s32.f32 %v1129
            %v1162 = vcvt.s32.f32 %v1130
            %v1163 = vcvt.s32.f32 %v1131
            %v1164 = vcvt.s32.f32 %v1132
            %v1165 = vcvt.s32.f32 %v1133
            %v1166 = vcvt.s32.f32 %v1134
            %v1167 = vcvt.s32.f32 %v1135
            %v1168 = vcvt.s32.f32 %v1136
            %v1169 = vcvt.s32.f32 %v1137
            %v1170 = vcvt.s32.f32 %v1138
            %v1171 = vcvt.s32.f32 %v1139
            %v1172 = vcvt.s32.f32 %v1140
            %v1173 = vcvt.s32.f32 %v1141
            %v1174 = vcvt.s32.f32 %v1142
            %v1175 = vcvt.s32.f32 %v1143
            %v1176 = vcvt.s32.f32 %v1144
            %v1177 = vcvt.s32.f32 %v1145
            %v1178 = vcvt.s32.f32 %v1146
            %v1179 = vcvt.s32.f32 %v1147
            %1180 = vmatpush.msra.mxu0 %v1163
            %1181 = vmatpush.msra.mxu0 %v1162
            %1182 = vmatpush.msra.mxu0 %v1161
            %1183 = vmatpush.msra.mxu0 %v1160
            %1184 = vmatpush.msra.mxu0 %v1159
            %1185 = vmatpush.msra.mxu0 %v1158
            %1186 = vmatpush.msra.mxu0 %v1157
            %1187 = vmatpush.msra.mxu0 %v1156
            %1188 = vmatpush.msra.mxu0 %v1155
            %1189 = vmatpush.msra.mxu0 %v1154
            %1190 = vmatpush.msra.mxu0 %v1153
            %1191 = vmatpush.msra.mxu0 %v1152
            %1192 = vmatpush.msra.mxu0 %v1151
            %1193 = vmatpush.msra.mxu0 %v1150
            %1194 = vmatpush.msra.mxu0 %v1149
            %1195 = vmatpush.msra.mxu0 %v1148
            %1196 = vmatmul.f32.gmra.mxu0 %v1065
            %v1197 = vpop.f32.mrf.mxu0
            %v1198 = vadd.f32 0.0, %v1197
            %1199 = vdwg.mxu0
            %1200 = vmatpush.msra.mxu0 %v1179
            %1201 = vmatpush.msra.mxu0 %v1178
            %1202 = vmatpush.msra.mxu0 %v1177
            %1203 = vmatpush.msra.mxu0 %v1176
            %1204 = vmatpush.msra.mxu0 %v1175
            %1205 = vmatpush.msra.mxu0 %v1174
            %1206 = vmatpush.msra.mxu0 %v1173
            %1207 = vmatpush.msra.mxu0 %v1172
            %1208 = vmatpush.msra.mxu0 %v1171
            %1209 = vmatpush.msra.mxu0 %v1170
            %1210 = vmatpush.msra.mxu0 %v1169
            %1211 = vmatpush.msra.mxu0 %v1168
            %1212 = vmatpush.msra.mxu0 %v1167
            %1213 = vmatpush.msra.mxu0 %v1166
            %1214 = vmatpush.msra.mxu0 %v1165
            %1215 = vmatpush.msra.mxu0 %v1164
            %1216 = vmatmul.f32.gmra.mxu0 %v1066
            %v1217 = vpop.f32.mrf.mxu0
            %v1218 = vadd.f32 %v1198, %v1217
            %1219 = vdwg.mxu0
            %v1220 = vsub.f32 1.0, %v1081
            %v1221 = vmul.f32 %v1218, %v1220
            %v1223 = vrot.slane %v1081, 7
            %v1225 = vmul.f32 %v1218, %v1223
            %v1227 = vrot.slane %v1225, 1
            %v1229 = vadd.f32 %v1221, %v1227
            %v1230 = vmax.f32 %v1229, 0.0
            %v1231 = vmin.f32 %v1230, 1.0
            %s1232 = scalar_lea.vmem %s159, %s1068 [#allocation8]
            %1233 = vst [vmem:[%s1232] sm:$0x1] %v1231
          $region56: #{tpu_custom_call.1} parent=50 // loop_footer
            %s1072 = sadd.s32 1, %s1068
          $region57: #{tpu_custom_call.1} parent=50 // loop_footer_branch
            %1067 = sbr.rel target = $region53
          $region58: #{tpu_custom_call.1} parent=50 // loop_exit
            _
        $region51: #{tpu_custom_call.1} parent=23 // pred_fallthru
          _
        %s1234 = sand.u32 %s77, 1
        %s1235 = scalar_lea.sflag [#allocation7], %s1234
        %s1236 = sand.u32 %s77, 1
        %s1237 = smul.addr %s1236, 8
        %s1238 = scalar_lea.vmem [#allocation8], %s1237
        // Predicated region
        $region59: #{tpu_custom_call.1} parent=23 // pred_check
          %p1239 = pneg %p87
        $region60: #{tpu_custom_call.1} parent=23 // pred_check_branch
          %1241 = sbr.rel (%p1239) target = $region62
        $region61: #{tpu_custom_call.1} parent=23 // pred_region
          %s1242 = smul.u32 %s25, %s24
          %1244 = vsyncadd %s1235, 0
          %s1245 = sadd.s32 %s1242, %s23
          %s1246 = smul.addr %s1245, 8
          %s1247 = scalar_lea.hbm %s1, %s1246
          %s1249 = sshll.u32 %s1238, 4
          %s1250 = int_to_ptr.vmem [resolvable:$true] %s1249
          %s1251 = sshll.u32 %s1247, 4
          %s1252 = int_to_ptr.hbm [resolvable:$true] %s1251
          %1254 = dma.vmem_to_hbm [thread:$0]  %s1250, 128, %s1252, %s1235
        $region62: #{tpu_custom_call.1} parent=23 // pred_fallthru
          _
      $region24: #{tpu_custom_call.1} parent=5 // pred_fallthru
        _
      %p1255 = scmp.le.s32.totalorder 2, %s13
      // Predicated region
      $region63: #{tpu_custom_call.1} parent=5 // pred_check
        %p1256 = pneg %p1255
      $region64: #{tpu_custom_call.1} parent=5 // pred_check_branch
        %1258 = sbr.rel (%p1256) target = $region66
      $region65: #{tpu_custom_call.1} parent=5 // pred_region
        %s1259 = ssub.s32 %s13, 2
        // Predicated region
        $region67: #{tpu_custom_call.1} parent=65 // pred_check
          %p1260 = pneg %p93
        $region68: #{tpu_custom_call.1} parent=65 // pred_check_branch
          %1262 = sbr.rel (%p1260) target = $region70
        $region69: #{tpu_custom_call.1} parent=65 // pred_region
          %s1263 = sand.u32 %s78, 1
          %s1264 = scalar_lea.sflag [#allocation7], %s1263
          %s1265 = sand.u32 %s78, 1
          %s1266 = smul.addr %s1265, 8
          %s1267 = scalar_lea.vmem [#allocation8], %s1266
          %1269 = dma.done %s1264, 128
        $region70: #{tpu_custom_call.1} parent=65 // pred_fallthru
          _
      $region66: #{tpu_custom_call.1} parent=5 // pred_fallthru
        _
    $region6: #{tpu_custom_call.1} parent=1 // loop_footer
      %s17 = sadd.s32 1, %s13
    $region7: #{tpu_custom_call.1} parent=1 // loop_footer_branch
      %12 = sbr.rel target = $region3
    $region8: #{tpu_custom_call.1} parent=1 // loop_exit
      _
    %1270 = vsyncpa [#allocation6], 1
    %s1271 = scalar_lea.sflag [#allocation6], 1
    %1272 = vsyncpa %s1271, 1
    %1273 = vsyncpa [#allocation7], 1
    %s1274 = scalar_lea.sflag [#allocation7], 1
    %1275 = vsyncpa %s1274, 1

</llo_original>
